<compile_context>
chip_gen: v5e
topology: v5e:2x2
jax: 0.10.0
libtpu: 0.0.40
codegen_flags: <defaults>
</compile_context>

<pallas_src>
import jax
import jax.numpy as jnp
import numpy as np
from jax.experimental import pallas as pl
from jax.experimental.pallas import tpu as pltpu


# ----------------------------------------------------------------------------
# Kernel A: additive attention + single-step GRU cell (per batch tile).
# ----------------------------------------------------------------------------
def _attn_gru_kernel(emb_ref, hid_ref, enc_ref, eproj_ref,
                     wa_h_ref, b_attn_ref, v_row_ref,
                     wih_e_ref, wih_c_ref, whh_ref, b_ih_ref, b_hh_ref,
                     hnew_ref, attn_ref):
    f32 = jnp.float32
    bf16 = jnp.bfloat16
    H = hid_ref.shape[1]

    emb = emb_ref[...]                                            # [tb, E] f32
    hid = hid_ref[...]                                            # [tb, H] f32

    # energy = tanh(hid @ Wa_h + (enc @ Wa_e) + b); enc @ Wa_e is hoisted out
    # of the per-step path (prepare_encoder) and passed in as e_proj (bf16).
    h_proj = jnp.dot(hid.astype(bf16), wa_h_ref[...],
                     preferred_element_type=f32)                  # [tb, H]
    energy = jnp.tanh(h_proj[:, None, :] + eproj_ref[...].astype(f32)
                      + b_attn_ref[...][None])                    # [tb, T, H]

    # scores = energy . v   (v is a [1, H] row -> free lane broadcast)
    scores = jnp.sum(energy * v_row_ref[...][None], axis=2)       # [tb, T]

    # softmax over T -- exact reciprocal (denom is [tb,1], negligible cost,
    # keeps attn rows summing to 1 exactly).
    m = jnp.max(scores, axis=1, keepdims=True)
    ex = jnp.exp(scores - m)
    denom = jnp.sum(ex, axis=1, keepdims=True)
    attn = ex / denom                                             # [tb, T]
    attn_ref[...] = attn

    # context = attn @ enc on the MXU (batched matmul, f32 accumulation)
    ctx = jnp.einsum('bqt,bth->bqh', attn[:, None, :].astype(bf16),
                     enc_ref[...], preferred_element_type=f32)[:, 0, :]

    # GRU cell, gate order (r, z, n) as in PyTorch; wih pre-split so the
    # kernel never slices a weight on the lane axis.
    gi = (jnp.dot(emb.astype(bf16), wih_e_ref[...], preferred_element_type=f32)
          + jnp.dot(ctx.astype(bf16), wih_c_ref[...], preferred_element_type=f32)
          + b_ih_ref[...])                                        # [tb, 3H]
    gh = (jnp.dot(hid.astype(bf16), whh_ref[...], preferred_element_type=f32)
          + b_hh_ref[...])                                        # [tb, 3H]
    r = jax.nn.sigmoid(gi[:, 0:H] + gh[:, 0:H])
    z = jax.nn.sigmoid(gi[:, H:2 * H] + gh[:, H:2 * H])
    n = jnp.tanh(gi[:, 2 * H:3 * H] + r * gh[:, 2 * H:3 * H])
    hnew_ref[...] = (1.0 - z) * n + z * hid                       # [tb, H]


# ----------------------------------------------------------------------------
# Kernel B: vocab projection streamed over vocab tiles with an online
# log-sum-exp (running max / sum carried in VMEM scratch).
# ----------------------------------------------------------------------------
def _vocab_lse_kernel(h_ref, wout_ref, b_out_ref,
                      logits_ref, lse_ref, m_scr, s_scr):
    j = pl.program_id(1)
    nv = pl.num_programs(1)
    f32 = jnp.float32

    @pl.when(j == 0)
    def _init():
        m_scr[...] = jnp.full(m_scr.shape, -1e30, dtype=f32)
        s_scr[...] = jnp.zeros(s_scr.shape, dtype=f32)

    logits = (jnp.dot(h_ref[...].astype(jnp.bfloat16), wout_ref[...],
                      preferred_element_type=f32)
              + b_out_ref[...])                                   # [tb, tile_v]
    logits_ref[...] = logits

    m_prev = m_scr[...]
    m_new = jnp.maximum(m_prev, jnp.max(logits, axis=1, keepdims=True))
    s_scr[...] = (s_scr[...] * jnp.exp(m_prev - m_new)
                  + jnp.sum(jnp.exp(logits - m_new), axis=1, keepdims=True))
    m_scr[...] = m_new

    @pl.when(j == nv - 1)
    def _finalize():
        lse_ref[...] = m_scr[...] + jnp.log(s_scr[...])


# ----------------------------------------------------------------------------
# Kernel C: second (memory-bound) pass of the two-pass log-softmax,
# aliased in place over the logits buffer.
# ----------------------------------------------------------------------------
def _log_softmax_finalize_kernel(logits_ref, lse_ref, logp_ref):
    logp_ref[...] = logits_ref[...] - lse_ref[...]


# ----------------------------------------------------------------------------
# Host-side plumbing
# ----------------------------------------------------------------------------
def _vmem_budget_bytes():
    """VMEM limit / tiling budget derived from the actual chip when possible."""
    phys = 64 * 1024 * 1024                       # conservative (v7x-class)
    try:
        phys = pltpu.get_tpu_info().vmem_capacity_bytes
    except Exception:
        pass
    return max(16 * 1024 * 1024, min(int(phys * 0.75), 96 * 1024 * 1024))


def _auto_tile_b(B, T, H, E, budget):
    """Largest batch tile for the attention+GRU kernel that fits the budget."""
    usable = int(budget * 0.6)
    w_bytes = 2 * 2 * (H * H + (E + H) * 3 * H + H * 3 * H)      # bf16 weights, 2 bufs
    per_row = 2 * (2 * T * H * 2 + (E + H) * 4 + (H + T) * 4)    # enc+eproj bf16, act f32
    cands = [B] + list(range((B // 8) * 8, 0, -8))
    for tb in cands:
        if tb <= 0 or B % tb != 0:
            continue
        if w_bytes + tb * per_row <= usable:
            return tb
    return B


def _tile_b_proj(B):
    """Batch tile for the vocab projection: whole batch when reasonable so the
    [H,V] weight is streamed from HBM only once."""
    if B <= 1024 or B % 8 != 0:
        return B
    for t in range(1024, 7, -8):
        if B % t == 0:
            return t
    return B


def _auto_tile_v(V_pad, H, tile_b, budget):
    """Largest vocab tile (multiple of 256 preferred) that keeps the streamed
    wout + logits blocks (double-buffered) inside the VMEM budget."""
    usable = int(budget * 0.6)
    per_col = 2 * (H * 2 + 4 + tile_b * 4)        # bf16 weight + bias + f32 logits, x2 bufs
    max_cols = max(128, usable // per_col)
    best = 128
    step = 256 if V_pad % 256 == 0 else 128
    t = step
    limit = min(V_pad, max_cols)
    while t <= limit:
        if V_pad % t == 0:
            best = t
        t += step
    return best


def pack_kernel_params(params):
    """Pre-split / pre-transpose / bf16-cast / pad weights (layout plumbing, once)."""
    H = params['whh_T'].shape[0]
    E = params['wih_T'].shape[0] - H
    V = params['wout_T'].shape[1]
    V_pad = ((V + 127) // 128) * 128

    wout = params['wout_T']                                 # [H, V]
    b_out = params['b_out']                                 # [1, V]
    if V_pad != V:
        wout = jnp.pad(wout, ((0, 0), (0, V_pad - V)))
        b_out = jnp.pad(b_out, ((0, 0), (0, V_pad - V)), constant_values=-1e30)

    wa_T = params['wa_T']                                   # [2H, H]
    return dict(
        V=V,
        embed=params['embed'],                              # [V, E]  f32
        wa_h=wa_T[:H, :].astype(jnp.bfloat16),              # [H, H]  hidden half
        wa_e=wa_T[H:, :],                                   # [H, H]  encoder half (hoisted, f32)
        b_attn=params['b_attn'],                            # [1, H]
        v_row=params['v'].T,                                # [1, H]  row vector
        wih_e=params['wih_T'][:E, :].astype(jnp.bfloat16),  # [E, 3H]
        wih_c=params['wih_T'][E:, :].astype(jnp.bfloat16),  # [H, 3H]
        whh=params['whh_T'].astype(jnp.bfloat16),           # [H, 3H]
        b_ih=params['b_ih'],                                # [1, 3H]
        b_hh=params['b_hh'],                                # [1, 3H]
        wout=wout.astype(jnp.bfloat16),                     # [H, V_pad]
        b_out=b_out.astype(jnp.float32),                    # [1, V_pad]
    )


def prepare_encoder(kparams, encoder_outputs):
    """Once per source sequence: transpose + encoder-side attention projection."""
    enc_bth = jnp.transpose(encoder_outputs, (1, 0, 2))              # [B, T, H]
    e_proj = jnp.einsum('bth,hk->btk', enc_bth, kparams['wa_e'])     # [B, T, H] f32
    return dict(enc=enc_bth.astype(jnp.bfloat16),
                e_proj=e_proj.astype(jnp.bfloat16))


def decoder_step(kparams, input_ids, last_hidden, enc_prep, tile_v=None):
    """One decode step. `enc_prep` comes from prepare_encoder (reused across steps)."""
    # Embedding row gather stays in XLA (no clean rectangular BlockSpec for it).
    emb = kparams['embed'][input_ids]            # [B, E]
    hid = last_hidden[-1]                        # [B, H]  (n_layers == 1)
    enc = enc_prep['enc']                        # [B, T, H] bf16
    e_proj = enc_prep['e_proj']                  # [B, T, H] bf16

    B, E = emb.shape
    H = hid.shape[1]
    T = enc.shape[1]
    V = int(kparams['V'])
    V_pad = kparams['b_out'].shape[-1]

    budget = _vmem_budget_bytes()

    # ------------------- Kernel A: attention + GRU cell -------------------
    tile_b = _auto_tile_b(B, T, H, E, budget)
    nb = B // tile_b

    h_new, attn = pl.pallas_call(
        _attn_gru_kernel,
        out_shape=(jax.ShapeDtypeStruct((B, H), jnp.float32),
                   jax.ShapeDtypeStruct((B, T), jnp.float32)),
        grid_spec=pltpu.PrefetchScalarGridSpec(
            num_scalar_prefetch=0,
            grid=(nb,),
            in_specs=[
                pl.BlockSpec((tile_b, E), lambda i: (i, 0)),          # emb
                pl.BlockSpec((tile_b, H), lambda i: (i, 0)),          # hid
                pl.BlockSpec((tile_b, T, H), lambda i: (i, 0, 0)),    # enc (bf16)
                pl.BlockSpec((tile_b, T, H), lambda i: (i, 0, 0)),    # e_proj (bf16)
                pl.BlockSpec((H, H), lambda i: (0, 0)),               # wa_h
                pl.BlockSpec((1, H), lambda i: (0, 0)),               # b_attn
                pl.BlockSpec((1, H), lambda i: (0, 0)),               # v row
                pl.BlockSpec((E, 3 * H), lambda i: (0, 0)),           # wih_e
                pl.BlockSpec((H, 3 * H), lambda i: (0, 0)),           # wih_c
                pl.BlockSpec((H, 3 * H), lambda i: (0, 0)),           # whh
                pl.BlockSpec((1, 3 * H), lambda i: (0, 0)),           # b_ih
                pl.BlockSpec((1, 3 * H), lambda i: (0, 0)),           # b_hh
            ],
            out_specs=(pl.BlockSpec((tile_b, H), lambda i: (i, 0)),
                       pl.BlockSpec((tile_b, T), lambda i: (i, 0)))),
        compiler_params=pltpu.CompilerParams(
            dimension_semantics=("parallel",),
            vmem_limit_bytes=budget),
    )(emb, hid, enc, e_proj,
      kparams['wa_h'], kparams['b_attn'], kparams['v_row'],
      kparams['wih_e'], kparams['wih_c'], kparams['whh'],
      kparams['b_ih'], kparams['b_hh'])

    # ------------- Kernel B: vocab projection + online logsumexp -------------
    tile_b2 = _tile_b_proj(B)
    nb2 = B // tile_b2
    if tile_v is None:
        tile_v = _auto_tile_v(V_pad, H, tile_b2, budget)
    assert V_pad % tile_v == 0
    nv = V_pad // tile_v

    cost = pl.CostEstimate(
        flops=int(2 * B * H * V_pad),
        transcendentals=int(B * V_pad),
        bytes_accessed=int(B * H * 4 + nb2 * (H * V_pad * 2 + V_pad * 4)
                           + B * V_pad * 4 + B * 4),
    )

    logits, lse = pl.pallas_call(
        _vocab_lse_kernel,
        out_shape=(jax.ShapeDtypeStruct((B, V_pad), jnp.float32),
                   jax.ShapeDtypeStruct((B, 1), jnp.float32)),
        grid_spec=pltpu.PrefetchScalarGridSpec(
            num_scalar_prefetch=0,
            grid=(nb2, nv),
            in_specs=[
                pl.BlockSpec((tile_b2, H), lambda i, j: (i, 0)),      # h_new
                pl.BlockSpec((H, tile_v), lambda i, j: (0, j)),       # wout tile (streamed)
                pl.BlockSpec((1, tile_v), lambda i, j: (0, j)),       # b_out tile
            ],
            out_specs=(pl.BlockSpec((tile_b2, tile_v), lambda i, j: (i, j)),
                       pl.BlockSpec((tile_b2, 1), lambda i, j: (i, 0))),
            scratch_shapes=[pltpu.VMEM((tile_b2, 1), jnp.float32),    # running max
                            pltpu.VMEM((tile_b2, 1), jnp.float32)]),  # running sum
        compiler_params=pltpu.CompilerParams(
            dimension_semantics=("parallel", "arbitrary"),
            vmem_limit_bytes=budget),
        cost_estimate=cost,
    )(h_new, kparams['wout'], kparams['b_out'])

    # --------- Kernel C: logp = logits - lse, in place over logits ---------
    logp_pad = pl.pallas_call(
        _log_softmax_finalize_kernel,
        out_shape=jax.ShapeDtypeStruct((B, V_pad), jnp.float32),
        grid=(nb2, nv),
        in_specs=[pl.BlockSpec((tile_b2, tile_v), lambda i, j: (i, j)),
                  pl.BlockSpec((tile_b2, 1), lambda i, j: (i, 0))],
        out_specs=pl.BlockSpec((tile_b2, tile_v), lambda i, j: (i, j)),
        input_output_aliases={0: 0},
        compiler_params=pltpu.CompilerParams(
            dimension_semantics=("parallel", "parallel"),
            vmem_limit_bytes=budget),
    )(logits, lse)

    logp = logp_pad[:, :V] if V_pad != V else logp_pad
    hidden = h_new[None]                 # [1, B, H]   (n_layers == 1)
    attn_weights = attn[:, None, :]      # [B, 1, T]
    return logp, hidden, attn_weights


def decoder_forward(kparams, input_ids, last_hidden, encoder_outputs, tile_v=None):
    """Mirrors Decoder.forward(input, last_hidden, encoder_outputs)."""
    enc_prep = prepare_encoder(kparams, encoder_outputs)
    return decoder_step(kparams, input_ids, last_hidden, enc_prep, tile_v=tile_v)


# ----------------------------------------------------------------------------
# Pure-JAX f32 reference (PyTorch semantics) and parameter init
# ----------------------------------------------------------------------------
def decoder_reference(params, input_ids, last_hidden, encoder_outputs):
    hp = jax.lax.Precision.HIGHEST
    emb = params['embed'][input_ids]                      # [B, E]
    hid = last_hidden[-1]                                 # [B, H]
    enc = jnp.transpose(encoder_outputs, (1, 0, 2))       # [B, T, H]
    H = hid.shape[1]
    T = enc.shape[1]

    h_rep = jnp.broadcast_to(hid[:, None, :], (hid.shape[0], T, H))
    cat = jnp.concatenate([h_rep, enc], axis=2)                               # [B, T, 2H]
    energy = jnp.tanh(jnp.einsum('btk,kh->bth', cat, params['wa_T'],
                                 precision=hp) + params['b_attn'][None])
    scores = jnp.einsum('bth,hk->btk', energy, params['v'], precision=hp)[:, :, 0]
    attn = jax.nn.softmax(scores, axis=1)                                     # [B, T]
    context = jnp.einsum('bt,bth->bh', attn, enc, precision=hp)               # [B, H]

    x = jnp.concatenate([emb, context], axis=1)                               # [B, E+H]
    gi = x @ params['wih_T'] + params['b_ih']
    gh = hid @ params['whh_T'] + params['b_hh']
    r = jax.nn.sigmoid(gi[:, :H] + gh[:, :H])
    z = jax.nn.sigmoid(gi[:, H:2 * H] + gh[:, H:2 * H])
    n = jnp.tanh(gi[:, 2 * H:] + r * gh[:, 2 * H:])
    h_new = (1.0 - z) * n + z * hid

    logits = h_new @ params['wout_T'] + params['b_out']
    logp = jax.nn.log_softmax(logits, axis=1)
    return logp, h_new[None], attn[:, None, :]


def init_params(key, embed_size, hidden_size, output_size, pad_idx=0):
    E, H, V = embed_size, hidden_size, output_size
    ks = jax.random.split(key, 10)

    def u(k, shape, bound):
        return jax.random.uniform(k, shape, jnp.float32, -bound, bound)

    embed = jax.random.normal(ks[0], (V, E), jnp.float32)
    embed = embed.at[pad_idx].set(0.0)                      # padding_idx row is zero

    b_attn_bound = 1.0 / np.sqrt(2 * H)                     # nn.Linear(2H, H)
    wa_T = u(ks[1], (2 * H, H), b_attn_bound)
    b_attn = u(ks[2], (1, H), b_attn_bound)
    v = u(ks[3], (H, 1), 1.0 / np.sqrt(H))                  # Attention.v

    g = 1.0 / np.sqrt(H)                                    # GRU init range
    wih_T = u(ks[4], (E + H, 3 * H), g)                     # gate order (r, z, n)
    whh_T = u(ks[5], (H, 3 * H), g)
    b_ih = u(ks[6], (1, 3 * H), g)
    b_hh = u(ks[7], (1, 3 * H), g)

    o = 1.0 / np.sqrt(H)                                    # nn.Linear(H, V)
    wout_T = u(ks[8], (H, V), o)
    b_out = u(ks[9], (1, V), o)

    return dict(embed=embed, wa_T=wa_T, b_attn=b_attn, v=v,
                wih_T=wih_T, whh_T=whh_T, b_ih=b_ih, b_hh=b_hh,
                wout_T=wout_T, b_out=b_out)


if __name__ == "__main__":
    # Lane-friendly small shapes: H, 3H and V are multiples of 128; tile_v=128
    # gives 2 vocab tiles so the tiled online log-softmax path is exercised.
    B, T = 8, 8                  # batch, encoder time steps
    E, H, V = 64, 128, 256       # embed_size, hidden_size, output_size (vocab)
    n_layers = 1

    key = jax.random.PRNGKey(0)
    kp, k1, k2, k3 = jax.random.split(key, 4)

    params = init_params(kp, E, H, V, pad_idx=0)
    kparams = pack_kernel_params(params)                 # once

    input_ids = jax.random.randint(k1, (B,), 0, V)
    last_hidden = 0.1 * jax.random.normal(k2, (n_layers, B, H), jnp.float32)
    encoder_outputs = 0.1 * jax.random.normal(k3, (T, B, H), jnp.float32)

    # Hoisted once per source sequence; every decode step reuses it.
    enc_prep = prepare_encoder(kparams, encoder_outputs)
    logp, hidden, attn_w = decoder_step(kparams, input_ids, last_hidden,
                                        enc_prep, tile_v=128)
    jax.block_until_ready((logp, hidden, attn_w))

    # Correctness vs. a pure-JAX f32 reference of the PyTorch semantics.
    logp_r, hidden_r, attn_r = decoder_reference(params, input_ids,
                                                 last_hidden, encoder_outputs)

    assert logp.shape == (B, V)
    assert hidden.shape == (n_layers, B, H)
    assert attn_w.shape == (B, 1, T)
    # bf16 matmul inputs with f32 accumulation -> loosened tolerances.
    assert np.allclose(np.asarray(logp), np.asarray(logp_r), rtol=3e-2, atol=3e-2)
    assert np.allclose(np.asarray(hidden), np.asarray(hidden_r), rtol=3e-2, atol=3e-2)
    assert np.allclose(np.asarray(attn_w), np.asarray(attn_r), rtol=3e-2, atol=1e-2)
    # structural checks (exact softmax normalization, logp sums to 1 in prob space)
    assert np.allclose(np.asarray(attn_w).sum(-1), 1.0, atol=1e-3)
    lp64 = np.asarray(logp, dtype=np.float64)
    assert np.allclose(np.log(np.exp(lp64).sum(-1)), 0.0, atol=1e-4)

    print("KERNEL_OK")
</pallas_src>

<mosaic_0001>
module attributes {stable_mosaic.version = 11 : i64} {
  func.func @_attn_gru_kernel(%arg0: i32, %arg1: memref<8x64xf32, #tpu.memory_space<vmem>>, %arg2: memref<8x128xf32, #tpu.memory_space<vmem>>, %arg3: memref<8x8x128xbf16, #tpu.memory_space<vmem>>, %arg4: memref<8x8x128xbf16, #tpu.memory_space<vmem>>, %arg5: memref<128x128xbf16, #tpu.memory_space<vmem>>, %arg6: memref<1x128xf32, #tpu.memory_space<vmem>>, %arg7: memref<1x128xf32, #tpu.memory_space<vmem>>, %arg8: memref<64x384xbf16, #tpu.memory_space<vmem>>, %arg9: memref<128x384xbf16, #tpu.memory_space<vmem>>, %arg10: memref<128x384xbf16, #tpu.memory_space<vmem>>, %arg11: memref<1x384xf32, #tpu.memory_space<vmem>>, %arg12: memref<1x384xf32, #tpu.memory_space<vmem>>, %arg13: memref<8x128xf32, #tpu.memory_space<vmem>>, %arg14: memref<8x8xf32, #tpu.memory_space<vmem>>) attributes {dimension_semantics = [#tpu.dimension_semantics<parallel>], iteration_bounds = array<i64: 1>, scalar_prefetch = 0 : i64, scratch_operands = 0 : i64, tpu.core_type = #tpu.core_type<tc>, window_params = [{transform_indices = @transform_0, window_bounds = array<i64: 8, 64>}, {transform_indices = @transform_1, window_bounds = array<i64: 8, 128>}, {transform_indices = @transform_2, window_bounds = array<i64: 8, 8, 128>}, {transform_indices = @transform_3, window_bounds = array<i64: 8, 8, 128>}, {pipeline_mode = #tpu.pipeline_mode<synchronous>, transform_indices = @transform_4, window_bounds = array<i64: 128, 128>}, {pipeline_mode = #tpu.pipeline_mode<synchronous>, transform_indices = @transform_5, window_bounds = array<i64: 1, 128>}, {pipeline_mode = #tpu.pipeline_mode<synchronous>, transform_indices = @transform_6, window_bounds = array<i64: 1, 128>}, {pipeline_mode = #tpu.pipeline_mode<synchronous>, transform_indices = @transform_7, window_bounds = array<i64: 64, 384>}, {pipeline_mode = #tpu.pipeline_mode<synchronous>, transform_indices = @transform_8, window_bounds = array<i64: 128, 384>}, {pipeline_mode = #tpu.pipeline_mode<synchronous>, transform_indices = @transform_9, window_bounds = array<i64: 128, 384>}, {pipeline_mode = #tpu.pipeline_mode<synchronous>, transform_indices = @transform_10, window_bounds = array<i64: 1, 384>}, {pipeline_mode = #tpu.pipeline_mode<synchronous>, transform_indices = @transform_11, window_bounds = array<i64: 1, 384>}, {transform_indices = @transform_12, window_bounds = array<i64: 8, 128>}, {transform_indices = @transform_13, window_bounds = array<i64: 8, 8>}]} {
    %c0 = arith.constant 0 : index
    %c0_0 = arith.constant 0 : index
    %0 = vector.load %arg1[%c0, %c0_0] : memref<8x64xf32, #tpu.memory_space<vmem>>, vector<8x64xf32>
    %c0_1 = arith.constant 0 : index
    %c0_2 = arith.constant 0 : index
    %1 = vector.load %arg2[%c0_1, %c0_2] : memref<8x128xf32, #tpu.memory_space<vmem>>, vector<8x128xf32>
    %2 = arith.truncf %1 : vector<8x128xf32> to vector<8x128xbf16>
    %c0_3 = arith.constant 0 : index
    %c0_4 = arith.constant 0 : index
    %3 = vector.load %arg5[%c0_3, %c0_4] : memref<128x128xbf16, #tpu.memory_space<vmem>>, vector<128x128xbf16>
    %cst = arith.constant dense<0.000000e+00> : vector<8x128xf32>
    %4 = tpu.matmul %2, %3, %cst {dimension_numbers = #tpu.dot_dimension_numbers<[1], [0], [0], [1], [0, 0, 1, 1], [], []>} : vector<8x128xbf16>, vector<128x128xbf16>, vector<8x128xf32> -> vector<8x128xf32>
    %5 = vector.shape_cast %4 : vector<8x128xf32> to vector<8x1x128xf32>
    %c0_5 = arith.constant 0 : index
    %c0_6 = arith.constant 0 : index
    %c0_7 = arith.constant 0 : index
    %6 = vector.load %arg4[%c0_5, %c0_6, %c0_7] : memref<8x8x128xbf16, #tpu.memory_space<vmem>>, vector<8x8x128xbf16>
    %7 = arith.extf %6 : vector<8x8x128xbf16> to vector<8x8x128xf32>
    %8 = vector.broadcast %5 : vector<8x1x128xf32> to vector<8x8x128xf32>
    %9 = arith.addf %8, %7 : vector<8x8x128xf32>
    %c0_8 = arith.constant 0 : index
    %c0_9 = arith.constant 0 : index
    %10 = vector.load %arg6[%c0_8, %c0_9] : memref<1x128xf32, #tpu.memory_space<vmem>>, vector<1x128xf32>
    %11 = vector.shape_cast %10 : vector<1x128xf32> to vector<1x1x128xf32>
    %12 = vector.broadcast %11 : vector<1x1x128xf32> to vector<8x8x128xf32>
    %13 = arith.addf %9, %12 : vector<8x8x128xf32>
    %14 = math.tanh %13 : vector<8x8x128xf32>
    %c0_10 = arith.constant 0 : index
    %c0_11 = arith.constant 0 : index
    %15 = vector.load %arg7[%c0_10, %c0_11] : memref<1x128xf32, #tpu.memory_space<vmem>>, vector<1x128xf32>
    %16 = vector.shape_cast %15 : vector<1x128xf32> to vector<1x1x128xf32>
    %17 = vector.broadcast %16 : vector<1x1x128xf32> to vector<8x8x128xf32>
    %18 = arith.mulf %14, %17 : vector<8x8x128xf32>
    %cst_12 = arith.constant dense<0.000000e+00> : vector<8x8xf32>
    %19 = vector.multi_reduction <add>, %18, %cst_12 [2] : vector<8x8x128xf32> to vector<8x8xf32>
    %cst_13 = arith.constant dense<0xFF800000> : vector<8xf32>
    %20 = vector.multi_reduction <maximumf>, %19, %cst_13 [1] : vector<8x8xf32> to vector<8xf32>
    %21 = vector.shape_cast %20 : vector<8xf32> to vector<8x1xf32>
    %22 = vector.broadcast %21 : vector<8x1xf32> to vector<8x8xf32>
    %23 = arith.subf %19, %22 : vector<8x8xf32>
    %24 = math.exp %23 : vector<8x8xf32>
    %cst_14 = arith.constant dense<0.000000e+00> : vector<8xf32>
    %25 = vector.multi_reduction <add>, %24, %cst_14 [1] : vector<8x8xf32> to vector<8xf32>
    %26 = vector.shape_cast %25 : vector<8xf32> to vector<8x1xf32>
    %27 = vector.broadcast %26 : vector<8x1xf32> to vector<8x8xf32>
    %28 = arith.divf %24, %27 : vector<8x8xf32>
    %c0_15 = arith.constant 0 : index
    %c0_16 = arith.constant 0 : index
    %29 = vector.load %arg14[%c0_15, %c0_16] : memref<8x8xf32, #tpu.memory_space<vmem>>, vector<8x8xf32>
    tpu.vector_store %arg14[%c0_15, %c0_16], %28 {strides = array<i32>} : memref<8x8xf32, #tpu.memory_space<vmem>>, vector<8x8xf32>,
    %30 = vector.shape_cast %28 : vector<8x8xf32> to vector<8x1x8xf32>
    %31 = arith.truncf %30 : vector<8x1x8xf32> to vector<8x1x8xbf16>
    %c0_17 = arith.constant 0 : index
    %c0_18 = arith.constant 0 : index
    %c0_19 = arith.constant 0 : index
    %32 = vector.load %arg3[%c0_17, %c0_18, %c0_19] : memref<8x8x128xbf16, #tpu.memory_space<vmem>>, vector<8x8x128xbf16>
    "tpu.trace_start"() <{level = 10 : i32, message = "bqt,bth->bqh"}> : () -> ()
    %cst_20 = arith.constant dense<0.000000e+00> : vector<8x1x128xf32>
    %33 = tpu.matmul %31, %32, %cst_20 {dimension_numbers = #tpu.dot_dimension_numbers<[2], [1], [1], [2], [0, 0, 0, 1, 1, 2], [0], [0]>} : vector<8x1x8xbf16>, vector<8x8x128xbf16>, vector<8x1x128xf32> -> vector<8x1x128xf32>
    "tpu.trace_stop"() : () -> ()
    %34 = vector.shape_cast %33 : vector<8x1x128xf32> to vector<8x128xf32>
    %35 = arith.truncf %0 : vector<8x64xf32> to vector<8x64xbf16>
    %c0_21 = arith.constant 0 : index
    %c0_22 = arith.constant 0 : index
    %36 = vector.load %arg8[%c0_21, %c0_22] : memref<64x384xbf16, #tpu.memory_space<vmem>>, vector<64x384xbf16>
    %cst_23 = arith.constant dense<0.000000e+00> : vector<8x384xf32>
    %37 = tpu.matmul %35, %36, %cst_23 {dimension_numbers = #tpu.dot_dimension_numbers<[1], [0], [0], [1], [0, 0, 1, 1], [], []>} : vector<8x64xbf16>, vector<64x384xbf16>, vector<8x384xf32> -> vector<8x384xf32>
    %38 = arith.truncf %34 : vector<8x128xf32> to vector<8x128xbf16>
    %c0_24 = arith.constant 0 : index
    %c0_25 = arith.constant 0 : index
    %39 = vector.load %arg9[%c0_24, %c0_25] : memref<128x384xbf16, #tpu.memory_space<vmem>>, vector<128x384xbf16>
    %cst_26 = arith.constant dense<0.000000e+00> : vector<8x384xf32>
    %40 = tpu.matmul %38, %39, %cst_26 {dimension_numbers = #tpu.dot_dimension_numbers<[1], [0], [0], [1], [0, 0, 1, 1], [], []>} : vector<8x128xbf16>, vector<128x384xbf16>, vector<8x384xf32> -> vector<8x384xf32>
    %41 = arith.addf %37, %40 : vector<8x384xf32>
    %c0_27 = arith.constant 0 : index
    %c0_28 = arith.constant 0 : index
    %42 = vector.load %arg11[%c0_27, %c0_28] : memref<1x384xf32, #tpu.memory_space<vmem>>, vector<1x384xf32>
    %43 = vector.broadcast %42 : vector<1x384xf32> to vector<8x384xf32>
    %44 = arith.addf %41, %43 : vector<8x384xf32>
    %45 = arith.truncf %1 : vector<8x128xf32> to vector<8x128xbf16>
    %c0_29 = arith.constant 0 : index
    %c0_30 = arith.constant 0 : index
    %46 = vector.load %arg10[%c0_29, %c0_30] : memref<128x384xbf16, #tpu.memory_space<vmem>>, vector<128x384xbf16>
    %cst_31 = arith.constant dense<0.000000e+00> : vector<8x384xf32>
    %47 = tpu.matmul %45, %46, %cst_31 {dimension_numbers = #tpu.dot_dimension_numbers<[1], [0], [0], [1], [0, 0, 1, 1], [], []>} : vector<8x128xbf16>, vector<128x384xbf16>, vector<8x384xf32> -> vector<8x384xf32>
    %c0_32 = arith.constant 0 : index
    %c0_33 = arith.constant 0 : index
    %48 = vector.load %arg12[%c0_32, %c0_33] : memref<1x384xf32, #tpu.memory_space<vmem>>, vector<1x384xf32>
    %49 = vector.broadcast %48 : vector<1x384xf32> to vector<8x384xf32>
    %50 = arith.addf %47, %49 : vector<8x384xf32>
    %51 = vector.extract_strided_slice %44 {offsets = [0, 0], sizes = [8, 128], strides = [1, 1]} : vector<8x384xf32> to vector<8x128xf32>
    %52 = vector.extract_strided_slice %50 {offsets = [0, 0], sizes = [8, 128], strides = [1, 1]} : vector<8x384xf32> to vector<8x128xf32>
    %53 = arith.addf %51, %52 : vector<8x128xf32>
    %54 = arith.negf %53 : vector<8x128xf32>
    %55 = math.exp %54 : vector<8x128xf32>
    %cst_34 = arith.constant 1.000000e+00 : f32
    %56 = vector.broadcast %cst_34 : f32 to vector<8x128xf32>
    %57 = arith.addf %56, %55 : vector<8x128xf32>
    %58 = arith.divf %56, %57 : vector<8x128xf32>
    %59 = vector.extract_strided_slice %44 {offsets = [0, 128], sizes = [8, 128], strides = [1, 1]} : vector<8x384xf32> to vector<8x128xf32>
    %60 = vector.extract_strided_slice %50 {offsets = [0, 128], sizes = [8, 128], strides = [1, 1]} : vector<8x384xf32> to vector<8x128xf32>
    %61 = arith.addf %59, %60 : vector<8x128xf32>
    %62 = arith.negf %61 : vector<8x128xf32>
    %63 = math.exp %62 : vector<8x128xf32>
    %cst_35 = arith.constant 1.000000e+00 : f32
    %64 = vector.broadcast %cst_35 : f32 to vector<8x128xf32>
    %65 = arith.addf %64, %63 : vector<8x128xf32>
    %66 = arith.divf %64, %65 : vector<8x128xf32>
    %67 = vector.extract_strided_slice %44 {offsets = [0, 256], sizes = [8, 128], strides = [1, 1]} : vector<8x384xf32> to vector<8x128xf32>
    %68 = vector.extract_strided_slice %50 {offsets = [0, 256], sizes = [8, 128], strides = [1, 1]} : vector<8x384xf32> to vector<8x128xf32>
    %69 = arith.mulf %58, %68 : vector<8x128xf32>
    %70 = arith.addf %67, %69 : vector<8x128xf32>
    %71 = math.tanh %70 : vector<8x128xf32>
    %cst_36 = arith.constant 1.000000e+00 : f32
    %72 = vector.broadcast %cst_36 : f32 to vector<8x128xf32>
    %73 = arith.subf %72, %66 : vector<8x128xf32>
    %74 = arith.mulf %73, %71 : vector<8x128xf32>
    %75 = arith.mulf %66, %1 : vector<8x128xf32>
    %76 = arith.addf %74, %75 : vector<8x128xf32>
    %c0_37 = arith.constant 0 : index
    %c0_38 = arith.constant 0 : index
    %77 = vector.load %arg13[%c0_37, %c0_38] : memref<8x128xf32, #tpu.memory_space<vmem>>, vector<8x128xf32>
    tpu.vector_store %arg13[%c0_37, %c0_38], %76 {strides = array<i32>} : memref<8x128xf32, #tpu.memory_space<vmem>>, vector<8x128xf32>,
    return
  }
  func.func @transform_0(%arg0: i32) -> (i32, i32) {
    %c0_i32 = arith.constant 0 : i32
    %c0_i32_0 = arith.constant 0 : i32
    return %arg0, %c0_i32 : i32, i32
  }
  func.func @transform_1(%arg0: i32) -> (i32, i32) {
    %c0_i32 = arith.constant 0 : i32
    %c0_i32_0 = arith.constant 0 : i32
    return %arg0, %c0_i32 : i32, i32
  }
  func.func @transform_2(%arg0: i32) -> (i32, i32, i32) {
    %c0_i32 = arith.constant 0 : i32
    %c0_i32_0 = arith.constant 0 : i32
    %c0_i32_1 = arith.constant 0 : i32
    return %arg0, %c0_i32, %c0_i32_0 : i32, i32, i32
  }
  func.func @transform_3(%arg0: i32) -> (i32, i32, i32) {
    %c0_i32 = arith.constant 0 : i32
    %c0_i32_0 = arith.constant 0 : i32
    %c0_i32_1 = arith.constant 0 : i32
    return %arg0, %c0_i32, %c0_i32_0 : i32, i32, i32
  }
  func.func @transform_4(%arg0: i32) -> (i32, i32) {
    %c0_i32 = arith.constant 0 : i32
    %c0_i32_0 = arith.constant 0 : i32
    %c0_i32_1 = arith.constant 0 : i32
    return %c0_i32, %c0_i32_0 : i32, i32
  }
  func.func @transform_5(%arg0: i32) -> (i32, i32) {
    %c0_i32 = arith.constant 0 : i32
    %c0_i32_0 = arith.constant 0 : i32
    %c0_i32_1 = arith.constant 0 : i32
    return %c0_i32, %c0_i32_0 : i32, i32
  }
  func.func @transform_6(%arg0: i32) -> (i32, i32) {
    %c0_i32 = arith.constant 0 : i32
    %c0_i32_0 = arith.constant 0 : i32
    %c0_i32_1 = arith.constant 0 : i32
    return %c0_i32, %c0_i32_0 : i32, i32
  }
  func.func @transform_7(%arg0: i32) -> (i32, i32) {
    %c0_i32 = arith.constant 0 : i32
    %c0_i32_0 = arith.constant 0 : i32
    %c0_i32_1 = arith.constant 0 : i32
    return %c0_i32, %c0_i32_0 : i32, i32
  }
  func.func @transform_8(%arg0: i32) -> (i32, i32) {
    %c0_i32 = arith.constant 0 : i32
    %c0_i32_0 = arith.constant 0 : i32
    %c0_i32_1 = arith.constant 0 : i32
    return %c0_i32, %c0_i32_0 : i32, i32
  }
  func.func @transform_9(%arg0: i32) -> (i32, i32) {
    %c0_i32 = arith.constant 0 : i32
    %c0_i32_0 = arith.constant 0 : i32
    %c0_i32_1 = arith.constant 0 : i32
    return %c0_i32, %c0_i32_0 : i32, i32
  }
  func.func @transform_10(%arg0: i32) -> (i32, i32) {
    %c0_i32 = arith.constant 0 : i32
    %c0_i32_0 = arith.constant 0 : i32
    %c0_i32_1 = arith.constant 0 : i32
    return %c0_i32, %c0_i32_0 : i32, i32
  }
  func.func @transform_11(%arg0: i32) -> (i32, i32) {
    %c0_i32 = arith.constant 0 : i32
    %c0_i32_0 = arith.constant 0 : i32
    %c0_i32_1 = arith.constant 0 : i32
    return %c0_i32, %c0_i32_0 : i32, i32
  }
  func.func @transform_12(%arg0: i32) -> (i32, i32) {
    %c0_i32 = arith.constant 0 : i32
    %c0_i32_0 = arith.constant 0 : i32
    return %arg0, %c0_i32 : i32, i32
  }
  func.func @transform_13(%arg0: i32) -> (i32, i32) {
    %c0_i32 = arith.constant 0 : i32
    %c0_i32_0 = arith.constant 0 : i32
    return %arg0, %c0_i32 : i32, i32
  }
}

</mosaic_0001>

<llo_original>
// kernel: tpu_custom_call.1
$region0: #{tpu_custom_call.1}
  #allocation0 [shape = 'u32[]', space=smem, size = 0x4, offset = 0x4, fixed_abs, tag = 'smem constant byte address 0x4 - core index']
  #allocation1 [shape = 'u32[72,128]{1,0:T(1,128)}', space=vmem, size = 0x9000, scoped, tag = 'internal scratch']
  %s0 = inlined_call_operand.hbm [shape: f32[8,64], index: 0, kind: input, shape index: {}]
  %s1 = inlined_call_operand.hbm [shape: f32[8,128], index: 1, kind: input, shape index: {}]
  %s2 = inlined_call_operand.hbm [shape: bf16[8,8,128], index: 2, kind: input, shape index: {}]
  %s3 = inlined_call_operand.hbm [shape: bf16[8,8,128], index: 3, kind: input, shape index: {}]
  %s4 = inlined_call_operand.hbm [shape: bf16[128,128], index: 4, kind: input, shape index: {}]
  %s5 = inlined_call_operand.hbm [shape: f32[1,128], index: 5, kind: input, shape index: {}]
  %s6 = inlined_call_operand.hbm [shape: f32[1,128], index: 6, kind: input, shape index: {}]
  %s7 = inlined_call_operand.hbm [shape: bf16[64,384], index: 7, kind: input, shape index: {}]
  %s8 = inlined_call_operand.hbm [shape: bf16[128,384], index: 8, kind: input, shape index: {}]
  %s9 = inlined_call_operand.hbm [shape: bf16[128,384], index: 9, kind: input, shape index: {}]
  %s10 = inlined_call_operand.vmem [shape: f32[1,384], index: 10, kind: input, shape index: {}]
  %s11 = inlined_call_operand.vmem [shape: f32[1,384], index: 11, kind: input, shape index: {}]
  %s12 = inlined_call_operand.hbm [shape: f32[8,128], index: 12, kind: output, shape index: {0}]
  %s13 = inlined_call_operand.hbm [shape: f32[8,8], index: 13, kind: output, shape index: {1}]
  %14 = xla_tuple %s12, %s13
  %s15 = sld [smem:[#allocation0]]
  $region106: #{tpu_custom_call.1} parent=0
    _
  %s17 = ssub.s32 1, %s15
  %s18 = scalar_select 0, %s17, %s15
  $region1: #{tpu_custom_call.1} parent=0
    #allocation2 [shape = 'u8[4096]{0}', space=vmem, size = 0x1000, scoped, tag = 'input window, operand 0, single buffered']
    #allocation3 [shape = 's32[1]{0}', space=sflag, size = 0x4, scoped, tag = 'scoped memory for tpu_custom_call.1']
    #allocation4 [shape = 's32[1]{0}', space=sflag, size = 0x4, scoped, tag = 'scoped memory for tpu_custom_call.1']
    #allocation5 [shape = 'u8[4096]{0}', space=vmem, size = 0x1000, scoped, tag = 'input window, operand 1, single buffered']
    #allocation6 [shape = 's32[1]{0}', space=sflag, size = 0x4, scoped, tag = 'scoped memory for tpu_custom_call.1']
    #allocation7 [shape = 'u8[16384]{0}', space=vmem, size = 0x4000, scoped, tag = 'input window, operand 2, single buffered']
    #allocation8 [shape = 'u8[16384]{0}', space=vmem, size = 0x4000, scoped, tag = 'input window, operand 3, single buffered']
    #allocation9 [shape = 's32[1]{0}', space=sflag, size = 0x4, scoped, tag = 'scoped memory for tpu_custom_call.1']
    #allocation10 [shape = 'u8[32768]{0}', space=vmem, size = 0x8000, scoped, tag = 'input window, operand 4, single buffered']
    #allocation11 [shape = 'u8[512]{0}', space=vmem, size = 0x400, scoped, tag = 'input window, operand 5, single buffered']
    #allocation12 [shape = 's32[1]{0}', space=sflag, size = 0x4, scoped, tag = 'scoped memory for tpu_custom_call.1']
    #allocation13 [shape = 'u8[512]{0}', space=vmem, size = 0x400, scoped, tag = 'input window, operand 6, single buffered']
    #allocation14 [shape = 'u8[49152]{0}', space=vmem, size = 0xc000, scoped, tag = 'input window, operand 7, single buffered']
    #allocation15 [shape = 's32[1]{0}', space=sflag, size = 0x4, scoped, tag = 'scoped memory for tpu_custom_call.1']
    #allocation16 [shape = 'u8[98304]{0}', space=vmem, size = 0x18000, scoped, tag = 'input window, operand 8, single buffered']
    #allocation17 [shape = 'u8[98304]{0}', space=vmem, size = 0x18000, scoped, tag = 'input window, operand 9, single buffered']
    #allocation18 [shape = 's32[1]{0}', space=sflag, size = 0x4, scoped, tag = 'scoped memory for tpu_custom_call.1']
    #allocation19 [shape = 'u8[4096]{0}', space=vmem, size = 0x1000, scoped, tag = 'output window, operand 0, single buffered']
    #allocation20 [shape = 'u8[4096]{0}', space=vmem, size = 0x1000, scoped, tag = 'output window, operand 1, single buffered']
    #allocation21 [shape = 's32[1]{0}', space=sflag, size = 0x4, scoped, tag = 'scoped memory for tpu_custom_call.1']
    %19 = vsyncpa [#allocation3], 0
    %20 = vsyncpa [#allocation6], 0
    %21 = vsyncpa [#allocation9], 0
    %22 = vsyncpa [#allocation12], 0
    %23 = vsyncpa [#allocation15], 0
    %24 = vsyncpa [#allocation18], 0
    %25 = vsyncpa [#allocation4], 0
    %26 = vsyncpa [#allocation21], 0
    // Predicated region
    $region2: #{tpu_custom_call.1} parent=1 // pred_check
      _
    $region3: #{tpu_custom_call.1} parent=1 // pred_check_branch
      %28 = sbr.rel (0) target = $region5
    $region4: #{tpu_custom_call.1} parent=1 // pred_region
      %30 = vsyncadd [#allocation3], 0
      %s32 = sshll.u32 %s0, 4
      %s33 = int_to_ptr.hbm [resolvable:$true] %s32
      %s34 = sshll.u32 [#allocation2], 4
      %s35 = int_to_ptr.vmem [resolvable:$true] %s34
      %37 = dma.hbm_to_vmem [thread:$0]  %s33, 128, %s35, [#allocation3]
    $region5: #{tpu_custom_call.1} parent=1 // pred_fallthru
      _
    // Predicated region
    $region6: #{tpu_custom_call.1} parent=1 // pred_check
      _
    $region7: #{tpu_custom_call.1} parent=1 // pred_check_branch
      %39 = sbr.rel (0) target = $region9
    $region8: #{tpu_custom_call.1} parent=1 // pred_region
      %41 = vsyncadd [#allocation6], 0
      %s43 = sshll.u32 %s1, 4
      %s44 = int_to_ptr.hbm [resolvable:$true] %s43
      %s45 = sshll.u32 [#allocation5], 4
      %s46 = int_to_ptr.vmem [resolvable:$true] %s45
      %48 = dma.hbm_to_vmem [thread:$0]  %s44, 128, %s46, [#allocation6]
    $region9: #{tpu_custom_call.1} parent=1 // pred_fallthru
      _
    // Predicated region
    $region10: #{tpu_custom_call.1} parent=1 // pred_check
      _
    $region11: #{tpu_custom_call.1} parent=1 // pred_check_branch
      %50 = sbr.rel (0) target = $region13
    $region12: #{tpu_custom_call.1} parent=1 // pred_region
      %52 = vsyncadd [#allocation6], 0
      %s53 = sshll.u32 %s2, 4
      %s54 = int_to_ptr.hbm [resolvable:$true] %s53
      %s55 = sshll.u32 [#allocation7], 4
      %s56 = int_to_ptr.vmem [resolvable:$true] %s55
      %61 = dma.hbm_to_vmem [thread:$0]  %s54, 512, %s56, [#allocation6], 64, 64, 4
    $region13: #{tpu_custom_call.1} parent=1 // pred_fallthru
      _
    // Predicated region
    $region14: #{tpu_custom_call.1} parent=1 // pred_check
      _
    $region15: #{tpu_custom_call.1} parent=1 // pred_check_branch
      %63 = sbr.rel (0) target = $region17
    $region16: #{tpu_custom_call.1} parent=1 // pred_region
      %65 = vsyncadd [#allocation9], 0
      %s66 = sshll.u32 %s3, 4
      %s67 = int_to_ptr.hbm [resolvable:$true] %s66
      %s68 = sshll.u32 [#allocation8], 4
      %s69 = int_to_ptr.vmem [resolvable:$true] %s68
      %74 = dma.hbm_to_vmem [thread:$0]  %s67, 512, %s69, [#allocation9], 64, 64, 4
    $region17: #{tpu_custom_call.1} parent=1 // pred_fallthru
      _
    // Predicated region
    $region18: #{tpu_custom_call.1} parent=1 // pred_check
      _
    $region19: #{tpu_custom_call.1} parent=1 // pred_check_branch
      %76 = sbr.rel (0) target = $region21
    $region20: #{tpu_custom_call.1} parent=1 // pred_region
      %78 = vsyncadd [#allocation9], 0
      %s79 = sshll.u32 %s4, 4
      %s80 = int_to_ptr.hbm [resolvable:$true] %s79
      %s81 = sshll.u32 [#allocation10], 4
      %s82 = int_to_ptr.vmem [resolvable:$true] %s81
      %87 = dma.hbm_to_vmem [thread:$0]  %s80, 1024, %s82, [#allocation9], 64, 64, 4
    $region21: #{tpu_custom_call.1} parent=1 // pred_fallthru
      _
    // Predicated region
    $region22: #{tpu_custom_call.1} parent=1 // pred_check
      _
    $region23: #{tpu_custom_call.1} parent=1 // pred_check_branch
      %89 = sbr.rel (0) target = $region25
    $region24: #{tpu_custom_call.1} parent=1 // pred_region
      %91 = vsyncadd [#allocation12], 0
      %s93 = sshll.u32 %s5, 4
      %s94 = int_to_ptr.hbm [resolvable:$true] %s93
      %s95 = sshll.u32 [#allocation11], 4
      %s96 = int_to_ptr.vmem [resolvable:$true] %s95
      %98 = dma.hbm_to_vmem [thread:$0]  %s94, 16, %s96, [#allocation12]
    $region25: #{tpu_custom_call.1} parent=1 // pred_fallthru
      _
    // Predicated region
    $region26: #{tpu_custom_call.1} parent=1 // pred_check
      _
    $region27: #{tpu_custom_call.1} parent=1 // pred_check_branch
      %100 = sbr.rel (0) target = $region29
    $region28: #{tpu_custom_call.1} parent=1 // pred_region
      %102 = vsyncadd [#allocation12], 0
      %s104 = sshll.u32 %s6, 4
      %s105 = int_to_ptr.hbm [resolvable:$true] %s104
      %s106 = sshll.u32 [#allocation13], 4
      %s107 = int_to_ptr.vmem [resolvable:$true] %s106
      %109 = dma.hbm_to_vmem [thread:$0]  %s105, 16, %s107, [#allocation12]
    $region29: #{tpu_custom_call.1} parent=1 // pred_fallthru
      _
    // Predicated region
    $region30: #{tpu_custom_call.1} parent=1 // pred_check
      _
    $region31: #{tpu_custom_call.1} parent=1 // pred_check_branch
      %111 = sbr.rel (0) target = $region33
    $region32: #{tpu_custom_call.1} parent=1 // pred_region
      %113 = vsyncadd [#allocation15], 0
      %s114 = sshll.u32 %s7, 4
      %s115 = int_to_ptr.hbm [resolvable:$true] %s114
      %s116 = sshll.u32 [#allocation14], 4
      %s117 = int_to_ptr.vmem [resolvable:$true] %s116
      %122 = dma.hbm_to_vmem [thread:$0]  %s115, 1536, %s117, [#allocation15], 192, 192, 12
    $region33: #{tpu_custom_call.1} parent=1 // pred_fallthru
      _
    // Predicated region
    $region34: #{tpu_custom_call.1} parent=1 // pred_check
      _
    $region35: #{tpu_custom_call.1} parent=1 // pred_check_branch
      %124 = sbr.rel (0) target = $region37
    $region36: #{tpu_custom_call.1} parent=1 // pred_region
      %126 = vsyncadd [#allocation15], 0
      %s127 = sshll.u32 %s8, 4
      %s128 = int_to_ptr.hbm [resolvable:$true] %s127
      %s129 = sshll.u32 [#allocation16], 4
      %s130 = int_to_ptr.vmem [resolvable:$true] %s129
      %135 = dma.hbm_to_vmem [thread:$0]  %s128, 3072, %s130, [#allocation15], 192, 192, 12
    $region37: #{tpu_custom_call.1} parent=1 // pred_fallthru
      _
    // Predicated region
    $region38: #{tpu_custom_call.1} parent=1 // pred_check
      _
    $region39: #{tpu_custom_call.1} parent=1 // pred_check_branch
      %137 = sbr.rel (0) target = $region41
    $region40: #{tpu_custom_call.1} parent=1 // pred_region
      %139 = vsyncadd [#allocation18], 0
      %s140 = sshll.u32 %s9, 4
      %s141 = int_to_ptr.hbm [resolvable:$true] %s140
      %s142 = sshll.u32 [#allocation17], 4
      %s143 = int_to_ptr.vmem [resolvable:$true] %s142
      %148 = dma.hbm_to_vmem [thread:$0]  %s141, 3072, %s143, [#allocation18], 192, 192, 12
    $region41: #{tpu_custom_call.1} parent=1 // pred_fallthru
      _
    // Predicated region
    $region42: #{tpu_custom_call.1} parent=1 // pred_check
      _
    $region43: #{tpu_custom_call.1} parent=1 // pred_check_branch
      %150 = sbr.rel (0) target = $region45
    $region44: #{tpu_custom_call.1} parent=1 // pred_region
      _
    $region45: #{tpu_custom_call.1} parent=1 // pred_fallthru
      _
    // Predicated region
    $region46: #{tpu_custom_call.1} parent=1 // pred_check
      _
    $region47: #{tpu_custom_call.1} parent=1 // pred_check_branch
      %152 = sbr.rel (0) target = $region49
    $region48: #{tpu_custom_call.1} parent=1 // pred_region
      _
    $region49: #{tpu_custom_call.1} parent=1 // pred_fallthru
      _
    // Predicated region
    $region50: #{tpu_custom_call.1} parent=1 // pred_check
      _
    $region51: #{tpu_custom_call.1} parent=1 // pred_check_branch
      %154 = sbr.rel (0) target = $region53
    $region52: #{tpu_custom_call.1} parent=1 // pred_region
      %156 = dma.done [#allocation3], 128
    $region53: #{tpu_custom_call.1} parent=1 // pred_fallthru
      _
    // Predicated region
    $region54: #{tpu_custom_call.1} parent=1 // pred_check
      _
    $region55: #{tpu_custom_call.1} parent=1 // pred_check_branch
      %158 = sbr.rel (0) target = $region57
    $region56: #{tpu_custom_call.1} parent=1 // pred_region
      %160 = dma.done [#allocation6], 128
    $region57: #{tpu_custom_call.1} parent=1 // pred_fallthru
      _
    // Predicated region
    $region58: #{tpu_custom_call.1} parent=1 // pred_check
      _
    $region59: #{tpu_custom_call.1} parent=1 // pred_check_branch
      %162 = sbr.rel (0) target = $region61
    $region60: #{tpu_custom_call.1} parent=1 // pred_region
      %164 = dma.done [#allocation6], 512
    $region61: #{tpu_custom_call.1} parent=1 // pred_fallthru
      _
    // Predicated region
    $region62: #{tpu_custom_call.1} parent=1 // pred_check
      _
    $region63: #{tpu_custom_call.1} parent=1 // pred_check_branch
      %166 = sbr.rel (0) target = $region65
    $region64: #{tpu_custom_call.1} parent=1 // pred_region
      %168 = dma.done [#allocation9], 512
    $region65: #{tpu_custom_call.1} parent=1 // pred_fallthru
      _
    // Predicated region
    $region66: #{tpu_custom_call.1} parent=1 // pred_check
      _
    $region67: #{tpu_custom_call.1} parent=1 // pred_check_branch
      %170 = sbr.rel (0) target = $region69
    $region68: #{tpu_custom_call.1} parent=1 // pred_region
      %172 = dma.done [#allocation9], 1024
    $region69: #{tpu_custom_call.1} parent=1 // pred_fallthru
      _
    // Predicated region
    $region70: #{tpu_custom_call.1} parent=1 // pred_check
      _
    $region71: #{tpu_custom_call.1} parent=1 // pred_check_branch
      %174 = sbr.rel (0) target = $region73
    $region72: #{tpu_custom_call.1} parent=1 // pred_region
      %176 = dma.done [#allocation12], 16
    $region73: #{tpu_custom_call.1} parent=1 // pred_fallthru
      _
    // Predicated region
    $region74: #{tpu_custom_call.1} parent=1 // pred_check
      _
    $region75: #{tpu_custom_call.1} parent=1 // pred_check_branch
      %178 = sbr.rel (0) target = $region77
    $region76: #{tpu_custom_call.1} parent=1 // pred_region
      %180 = dma.done [#allocation12], 16
    $region77: #{tpu_custom_call.1} parent=1 // pred_fallthru
      _
    // Predicated region
    $region78: #{tpu_custom_call.1} parent=1 // pred_check
      _
    $region79: #{tpu_custom_call.1} parent=1 // pred_check_branch
      %182 = sbr.rel (0) target = $region81
    $region80: #{tpu_custom_call.1} parent=1 // pred_region
      %184 = dma.done [#allocation15], 1536
    $region81: #{tpu_custom_call.1} parent=1 // pred_fallthru
      _
    // Predicated region
    $region82: #{tpu_custom_call.1} parent=1 // pred_check
      _
    $region83: #{tpu_custom_call.1} parent=1 // pred_check_branch
      %186 = sbr.rel (0) target = $region85
    $region84: #{tpu_custom_call.1} parent=1 // pred_region
      %188 = dma.done [#allocation15], 3072
    $region85: #{tpu_custom_call.1} parent=1 // pred_fallthru
      _
    // Predicated region
    $region86: #{tpu_custom_call.1} parent=1 // pred_check
      _
    $region87: #{tpu_custom_call.1} parent=1 // pred_check_branch
      %190 = sbr.rel (0) target = $region89
    $region88: #{tpu_custom_call.1} parent=1 // pred_region
      %192 = dma.done [#allocation18], 3072
    $region89: #{tpu_custom_call.1} parent=1 // pred_fallthru
      _
    %v194 = vld [vmem:[#allocation2] sm:$0xff]
    %v195 = vld [vmem:[#allocation5] sm:$0xff]
    %v196 = vpack.c.bf16 %v195, %v195
    %v197 = vld [vmem:[#allocation10] sm:$0xf]
    %v198 = vld [vmem:[#allocation10 + $0x4] sm:$0xf]
    %v199 = vld [vmem:[#allocation10 + $0x8] sm:$0xf]
    %v200 = vld [vmem:[#allocation10 + $0xc] sm:$0xf]
    %v201 = vld [vmem:[#allocation10 + $0x10] sm:$0xf]
    %v202 = vld [vmem:[#allocation10 + $0x14] sm:$0xf]
    %v203 = vld [vmem:[#allocation10 + $0x18] sm:$0xf]
    %v204 = vld [vmem:[#allocation10 + $0x1c] sm:$0xf]
    %v205 = vld [vmem:[#allocation10 + $0x20] sm:$0xf]
    %v206 = vld [vmem:[#allocation10 + $0x24] sm:$0xf]
    %v207 = vld [vmem:[#allocation10 + $0x28] sm:$0xf]
    %v208 = vld [vmem:[#allocation10 + $0x2c] sm:$0xf]
    %v209 = vld [vmem:[#allocation10 + $0x30] sm:$0xf]
    %v210 = vld [vmem:[#allocation10 + $0x34] sm:$0xf]
    %v211 = vld [vmem:[#allocation10 + $0x38] sm:$0xf]
    %v212 = vld [vmem:[#allocation10 + $0x3c] sm:$0xf]
    %v229 = vunpack.c.l.b16 %v197
    %v230 = vunpack.c.l.b16 %v198
    %v231 = vunpack.c.l.b16 %v199
    %v232 = vunpack.c.l.b16 %v200
    %v233 = vunpack.c.l.b16 %v201
    %v234 = vunpack.c.l.b16 %v202
    %v235 = vunpack.c.l.b16 %v203
    %v236 = vunpack.c.l.b16 %v204
    %v237 = vunpack.c.l.b16 %v205
    %v238 = vunpack.c.l.b16 %v206
    %v239 = vunpack.c.l.b16 %v207
    %v240 = vunpack.c.l.b16 %v208
    %v241 = vunpack.c.l.b16 %v209
    %v242 = vunpack.c.l.b16 %v210
    %v243 = vunpack.c.l.b16 %v211
    %v244 = vunpack.c.l.b16 %v212
    %v245 = vpack.c.b16 %v230, %v229
    %v246 = vpack.c.b16 %v232, %v231
    %v247 = vpack.c.b16 %v234, %v233
    %v248 = vpack.c.b16 %v236, %v235
    %v249 = vpack.c.b16 %v238, %v237
    %v250 = vpack.c.b16 %v240, %v239
    %v251 = vpack.c.b16 %v242, %v241
    %v252 = vpack.c.b16 %v244, %v243
    %261 = vmatpush.bf16.msra.mxu0 %v252
    %262 = vmatpush.bf16.msra.mxu0 %v251
    %263 = vmatpush.bf16.msra.mxu0 %v250
    %264 = vmatpush.bf16.msra.mxu0 %v249
    %265 = vmatpush.bf16.msra.mxu0 %v248
    %266 = vmatpush.bf16.msra.mxu0 %v247
    %267 = vmatpush.bf16.msra.mxu0 %v246
    %268 = vmatpush.bf16.msra.mxu0 %v245
    %269 = vmatmul.bf16.gmra.mxu0 %v196
    %v270 = vpop.f32.mrf.mxu0
    %v271 = vadd.f32 0.0, %v270
    %v272 = vpop.f32.mrf.mxu0
    %273 = vdwg.mxu0
    %v275 = vrot.slane %v271, 1
    %v276 = vrot.slane %v271, 2
    %v277 = vrot.slane %v271, 3
    %v278 = vrot.slane %v271, 4
    %v279 = vrot.slane %v271, 5
    %v280 = vrot.slane %v271, 6
    %v281 = vrot.slane %v271, 7
    %v282 = vld [vmem:[#allocation8] sm:$0xf]
    %v283 = vld [vmem:[#allocation8 + $0x4] sm:$0xf]
    %v284 = vld [vmem:[#allocation8 + $0x8] sm:$0xf]
    %v285 = vld [vmem:[#allocation8 + $0xc] sm:$0xf]
    %v286 = vld [vmem:[#allocation8 + $0x10] sm:$0xf]
    %v287 = vld [vmem:[#allocation8 + $0x14] sm:$0xf]
    %v288 = vld [vmem:[#allocation8 + $0x18] sm:$0xf]
    %v289 = vld [vmem:[#allocation8 + $0x1c] sm:$0xf]
    %v290 = vunpack.c.l.bf16 %v282
    %v291 = vunpack.c.l.bf16 %v283
    %v292 = vunpack.c.l.bf16 %v284
    %v293 = vunpack.c.l.bf16 %v285
    %v294 = vunpack.c.l.bf16 %v286
    %v295 = vunpack.c.l.bf16 %v287
    %v296 = vunpack.c.l.bf16 %v288
    %v297 = vunpack.c.l.bf16 %v289
    %v298 = vperm.slane %v271, 0
    %v299 = vperm.slane %v275, 0
    %v300 = vperm.slane %v276, 0
    %v301 = vperm.slane %v277, 0
    %v302 = vperm.slane %v278, 0
    %v303 = vperm.slane %v279, 0
    %v304 = vperm.slane %v280, 0
    %v305 = vperm.slane %v281, 0
    %v314 = vadd.f32 %v298, %v290
    %v315 = vadd.f32 %v299, %v291
    %v316 = vadd.f32 %v300, %v292
    %v317 = vadd.f32 %v301, %v293
    %v318 = vadd.f32 %v302, %v294
    %v319 = vadd.f32 %v303, %v295
    %v320 = vadd.f32 %v304, %v296
    %v321 = vadd.f32 %v305, %v297
    %v322 = vld [vmem:[#allocation11] sm:$0x1]
    %v324 = vperm.slane %v322, 0
    %v326 = vadd.f32 %v314, %v324
    %v327 = vadd.f32 %v315, %v324
    %v328 = vadd.f32 %v316, %v324
    %v329 = vadd.f32 %v317, %v324
    %v330 = vadd.f32 %v318, %v324
    %v331 = vadd.f32 %v319, %v324
    %v332 = vadd.f32 %v320, %v324
    %v333 = vadd.f32 %v321, %v324
    %v334 = vtanh.pop %v326
    %v335 = vtanh.pop %v327
    %v336 = vtanh.pop %v328
    %v337 = vtanh.pop %v329
    %v338 = vtanh.pop %v330
    %v339 = vtanh.pop %v331
    %v340 = vtanh.pop %v332
    %v341 = vtanh.pop %v333
    %v342 = vld [vmem:[#allocation13] sm:$0x1]
    %v344 = vperm.slane %v342, 0
    %v346 = vmul.f32 %v334, %v344
    %v347 = vmul.f32 %v335, %v344
    %v348 = vmul.f32 %v336, %v344
    %v349 = vmul.f32 %v337, %v344
    %v350 = vmul.f32 %v338, %v344
    %v351 = vmul.f32 %v339, %v344
    %v352 = vmul.f32 %v340, %v344
    %v353 = vmul.f32 %v341, %v344
    %354 = vadd.xlane.f32.xlu0 %v346
    %v355 = vpop.xlane.xlu0 %354
    %356 = vadd.xlane.f32.xlu0 %v347
    %v357 = vpop.xlane.xlu0 %356
    %358 = vadd.xlane.f32.xlu0 %v348
    %v359 = vpop.xlane.xlu0 %358
    %360 = vadd.xlane.f32.xlu0 %v349
    %v361 = vpop.xlane.xlu0 %360
    %362 = vadd.xlane.f32.xlu0 %v350
    %v363 = vpop.xlane.xlu0 %362
    %364 = vadd.xlane.f32.xlu0 %v351
    %v365 = vpop.xlane.xlu0 %364
    %366 = vadd.xlane.f32.xlu0 %v352
    %v367 = vpop.xlane.xlu0 %366
    %368 = vadd.xlane.f32.xlu0 %v353
    %v369 = vpop.xlane.xlu0 %368
    %v378 = vlaneseq
    %v379 = vand.u32 %v378, 127
    %v380 = vperm.slane %v355, %v379
    %v381 = vperm.slane %v357, %v379
    %v382 = vperm.slane %v359, %v379
    %v383 = vperm.slane %v361, %v379
    %v384 = vperm.slane %v363, %v379
    %v385 = vperm.slane %v365, %v379
    %v386 = vperm.slane %v367, %v379
    %v387 = vperm.slane %v369, %v379
    %vm388 = vcmask 1041409
    %v389 = vsel %vm388, %v381, %v380
    %vm390 = vcmask 1042434
    %v391 = vsel %vm390, %v382, %v389
    %vm392 = vcmask 1043459
    %v393 = vsel %vm392, %v383, %v391
    %vm394 = vcmask 1044484
    %v395 = vsel %vm394, %v384, %v393
    %vm396 = vcmask 1045509
    %v397 = vsel %vm396, %v385, %v395
    %vm398 = vcmask 1046534
    %v399 = vsel %vm398, %v386, %v397
    %vm400 = vcmask 1047559
    %v401 = vsel %vm400, %v387, %v399
    %vm403 = vcmask 64512
    %v404 = vsel %vm403, %v401, -inf
    %405 = vmax.xlane.f32.xlu0 %v404
    %v406 = vpop.xlane.xlu0 %405
    %v408 = vperm.slane %v406, 0
    %v409 = vperm.slane %v406, 1
    %v410 = vperm.slane %v406, 2
    %v411 = vperm.slane %v406, 3
    %v412 = vperm.slane %v406, 4
    %v413 = vperm.slane %v406, 5
    %v414 = vperm.slane %v406, 6
    %v415 = vperm.slane %v406, 7
    %v424 = vsub.f32 %v355, %v408
    %v425 = vsub.f32 %v357, %v409
    %v426 = vsub.f32 %v359, %v410
    %v427 = vsub.f32 %v361, %v411
    %v428 = vsub.f32 %v363, %v412
    %v429 = vsub.f32 %v365, %v413
    %v430 = vsub.f32 %v367, %v414
    %v431 = vsub.f32 %v369, %v415
    %v432 = vmul.f32 %v424, 1.442695
    %v433 = vpow.pop %v432
    %v434 = vmul.f32 %v425, 1.442695
    %v435 = vpow.pop %v434
    %v436 = vmul.f32 %v426, 1.442695
    %v437 = vpow.pop %v436
    %v438 = vmul.f32 %v427, 1.442695
    %v439 = vpow.pop %v438
    %v440 = vmul.f32 %v428, 1.442695
    %v441 = vpow.pop %v440
    %v442 = vmul.f32 %v429, 1.442695
    %v443 = vpow.pop %v442
    %v444 = vmul.f32 %v430, 1.442695
    %v445 = vpow.pop %v444
    %v446 = vmul.f32 %v431, 1.442695
    %v447 = vpow.pop %v446
    %456 = vset.pattern.permute.xlu0 0
    %457 = vperm.xlu0 %456, %v433
    %v458 = vpop.permute.xlu0 %457
    %459 = vset.pattern.permute.xlu0 0
    %460 = vperm.xlu0 %459, %v435
    %v461 = vpop.permute.xlu0 %460
    %462 = vset.pattern.permute.xlu0 0
    %463 = vperm.xlu0 %462, %v437
    %v464 = vpop.permute.xlu0 %463
    %465 = vset.pattern.permute.xlu0 0
    %466 = vperm.xlu0 %465, %v439
    %v467 = vpop.permute.xlu0 %466
    %468 = vset.pattern.permute.xlu0 0
    %469 = vperm.xlu0 %468, %v441
    %v470 = vpop.permute.xlu0 %469
    %471 = vset.pattern.permute.xlu0 0
    %472 = vperm.xlu0 %471, %v443
    %v473 = vpop.permute.xlu0 %472
    %474 = vset.pattern.permute.xlu0 0
    %475 = vperm.xlu0 %474, %v445
    %v476 = vpop.permute.xlu0 %475
    %477 = vset.pattern.permute.xlu0 0
    %478 = vperm.xlu0 %477, %v447
    %v479 = vpop.permute.xlu0 %478
    %v480 = vperm.slane %v458, %v379
    %v481 = vperm.slane %v461, %v379
    %v482 = vperm.slane %v464, %v379
    %v483 = vperm.slane %v467, %v379
    %v484 = vperm.slane %v470, %v379
    %v485 = vperm.slane %v473, %v379
    %v486 = vperm.slane %v476, %v379
    %v487 = vperm.slane %v479, %v379
    %v488 = vsel %vm388, %v481, %v480
    %v489 = vsel %vm390, %v482, %v488
    %v490 = vsel %vm392, %v483, %v489
    %v491 = vsel %vm394, %v484, %v490
    %v492 = vsel %vm396, %v485, %v491
    %v493 = vsel %vm398, %v486, %v492
    %v494 = vsel %vm400, %v487, %v493
    %v496 = vsel %vm403, %v494, 0.0
    %497 = vadd.xlane.f32.xlu0 %v496
    %v498 = vpop.xlane.xlu0 %497
    %v500 = vperm.slane %v498, 0
    %v501 = vperm.slane %v498, 1
    %v502 = vperm.slane %v498, 2
    %v503 = vperm.slane %v498, 3
    %v504 = vperm.slane %v498, 4
    %v505 = vperm.slane %v498, 5
    %v506 = vperm.slane %v498, 6
    %v507 = vperm.slane %v498, 7
    %v516 = vrcp.pop %v500
    %v517 = vmul.f32 %v500, %v516
    %v518 = vsub.f32 1.0, %v517
    %v519 = vmul.f32 %v516, %v518
    %v520 = vadd.f32 %v516, %v519
    %vm521 = vweird.f32 %v500
    %vm522 = vweird.f32 %v516
    %vm523 = vmor %vm521, %vm522
    %v524 = vsel %vm523, %v516, %v520
    %v525 = vand.u32 2147483647, %v500
    %vm526 = vcmp.eq.f32.partialorder %v525, 8.507059e+37
    %v527 = vand.u32 %v500, 2147483648
    %v528 = vor.u32 1.1754944e-38, %v527
    %v529 = vsel %vm526, %v528, %v524
    %v530 = vmul.f32 %v433, %v529
    %v531 = vrcp.pop %v501
    %v532 = vmul.f32 %v501, %v531
    %v533 = vsub.f32 1.0, %v532
    %v534 = vmul.f32 %v531, %v533
    %v535 = vadd.f32 %v531, %v534
    %vm536 = vweird.f32 %v501
    %vm537 = vweird.f32 %v531
    %vm538 = vmor %vm536, %vm537
    %v539 = vsel %vm538, %v531, %v535
    %v540 = vand.u32 2147483647, %v501
    %vm541 = vcmp.eq.f32.partialorder %v540, 8.507059e+37
    %v542 = vand.u32 %v501, 2147483648
    %v543 = vor.u32 1.1754944e-38, %v542
    %v544 = vsel %vm541, %v543, %v539
    %v545 = vmul.f32 %v435, %v544
    %v546 = vrcp.pop %v502
    %v547 = vmul.f32 %v502, %v546
    %v548 = vsub.f32 1.0, %v547
    %v549 = vmul.f32 %v546, %v548
    %v550 = vadd.f32 %v546, %v549
    %vm551 = vweird.f32 %v502
    %vm552 = vweird.f32 %v546
    %vm553 = vmor %vm551, %vm552
    %v554 = vsel %vm553, %v546, %v550
    %v555 = vand.u32 2147483647, %v502
    %vm556 = vcmp.eq.f32.partialorder %v555, 8.507059e+37
    %v557 = vand.u32 %v502, 2147483648
    %v558 = vor.u32 1.1754944e-38, %v557
    %v559 = vsel %vm556, %v558, %v554
    %v560 = vmul.f32 %v437, %v559
    %v561 = vrcp.pop %v503
    %v562 = vmul.f32 %v503, %v561
    %v563 = vsub.f32 1.0, %v562
    %v564 = vmul.f32 %v561, %v563
    %v565 = vadd.f32 %v561, %v564
    %vm566 = vweird.f32 %v503
    %vm567 = vweird.f32 %v561
    %vm568 = vmor %vm566, %vm567
    %v569 = vsel %vm568, %v561, %v565
    %v570 = vand.u32 2147483647, %v503
    %vm571 = vcmp.eq.f32.partialorder %v570, 8.507059e+37
    %v572 = vand.u32 %v503, 2147483648
    %v573 = vor.u32 1.1754944e-38, %v572
    %v574 = vsel %vm571, %v573, %v569
    %v575 = vmul.f32 %v439, %v574
    %v576 = vrcp.pop %v504
    %v577 = vmul.f32 %v504, %v576
    %v578 = vsub.f32 1.0, %v577
    %v579 = vmul.f32 %v576, %v578
    %v580 = vadd.f32 %v576, %v579
    %vm581 = vweird.f32 %v504
    %vm582 = vweird.f32 %v576
    %vm583 = vmor %vm581, %vm582
    %v584 = vsel %vm583, %v576, %v580
    %v585 = vand.u32 2147483647, %v504
    %vm586 = vcmp.eq.f32.partialorder %v585, 8.507059e+37
    %v587 = vand.u32 %v504, 2147483648
    %v588 = vor.u32 1.1754944e-38, %v587
    %v589 = vsel %vm586, %v588, %v584
    %v590 = vmul.f32 %v441, %v589
    %v591 = vrcp.pop %v505
    %v592 = vmul.f32 %v505, %v591
    %v593 = vsub.f32 1.0, %v592
    %v594 = vmul.f32 %v591, %v593
    %v595 = vadd.f32 %v591, %v594
    %vm596 = vweird.f32 %v505
    %vm597 = vweird.f32 %v591
    %vm598 = vmor %vm596, %vm597
    %v599 = vsel %vm598, %v591, %v595
    %v600 = vand.u32 2147483647, %v505
    %vm601 = vcmp.eq.f32.partialorder %v600, 8.507059e+37
    %v602 = vand.u32 %v505, 2147483648
    %v603 = vor.u32 1.1754944e-38, %v602
    %v604 = vsel %vm601, %v603, %v599
    %v605 = vmul.f32 %v443, %v604
    %v606 = vrcp.pop %v506
    %v607 = vmul.f32 %v506, %v606
    %v608 = vsub.f32 1.0, %v607
    %v609 = vmul.f32 %v606, %v608
    %v610 = vadd.f32 %v606, %v609
    %vm611 = vweird.f32 %v506
    %vm612 = vweird.f32 %v606
    %vm613 = vmor %vm611, %vm612
    %v614 = vsel %vm613, %v606, %v610
    %v615 = vand.u32 2147483647, %v506
    %vm616 = vcmp.eq.f32.partialorder %v615, 8.507059e+37
    %v617 = vand.u32 %v506, 2147483648
    %v618 = vor.u32 1.1754944e-38, %v617
    %v619 = vsel %vm616, %v618, %v614
    %v620 = vmul.f32 %v445, %v619
    %v621 = vrcp.pop %v507
    %v622 = vmul.f32 %v507, %v621
    %v623 = vsub.f32 1.0, %v622
    %v624 = vmul.f32 %v621, %v623
    %v625 = vadd.f32 %v621, %v624
    %vm626 = vweird.f32 %v507
    %vm627 = vweird.f32 %v621
    %vm628 = vmor %vm626, %vm627
    %v629 = vsel %vm628, %v621, %v625
    %v630 = vand.u32 2147483647, %v507
    %vm631 = vcmp.eq.f32.partialorder %v630, 8.507059e+37
    %v632 = vand.u32 %v507, 2147483648
    %v633 = vor.u32 1.1754944e-38, %v632
    %v634 = vsel %vm631, %v633, %v629
    %v635 = vmul.f32 %v447, %v634
    %644 = vset.pattern.permute.xlu0 0
    %645 = vperm.xlu0 %644, %v530
    %v646 = vpop.permute.xlu0 %645
    %647 = vset.pattern.permute.xlu0 0
    %648 = vperm.xlu0 %647, %v545
    %v649 = vpop.permute.xlu0 %648
    %650 = vset.pattern.permute.xlu0 0
    %651 = vperm.xlu0 %650, %v560
    %v652 = vpop.permute.xlu0 %651
    %653 = vset.pattern.permute.xlu0 0
    %654 = vperm.xlu0 %653, %v575
    %v655 = vpop.permute.xlu0 %654
    %656 = vset.pattern.permute.xlu0 0
    %657 = vperm.xlu0 %656, %v590
    %v658 = vpop.permute.xlu0 %657
    %659 = vset.pattern.permute.xlu0 0
    %660 = vperm.xlu0 %659, %v605
    %v661 = vpop.permute.xlu0 %660
    %662 = vset.pattern.permute.xlu0 0
    %663 = vperm.xlu0 %662, %v620
    %v664 = vpop.permute.xlu0 %663
    %665 = vset.pattern.permute.xlu0 0
    %666 = vperm.xlu0 %665, %v635
    %v667 = vpop.permute.xlu0 %666
    %v668 = vperm.slane %v646, %v379
    %v669 = vperm.slane %v649, %v379
    %v670 = vperm.slane %v652, %v379
    %v671 = vperm.slane %v655, %v379
    %v672 = vperm.slane %v658, %v379
    %v673 = vperm.slane %v661, %v379
    %v674 = vperm.slane %v664, %v379
    %v675 = vperm.slane %v667, %v379
    %v676 = vsel %vm388, %v669, %v668
    %v677 = vsel %vm390, %v670, %v676
    %v678 = vsel %vm392, %v671, %v677
    %v679 = vsel %vm394, %v672, %v678
    %v680 = vsel %vm396, %v673, %v679
    %v681 = vsel %vm398, %v674, %v680
    %v682 = vsel %vm400, %v675, %v681
    %684 = vst.msk [vmem:[#allocation20] sm:$0xff] %vm403, %v682
    %v685 = vpack.c.bf16 %v530, %v530
    %v686 = vpack.c.bf16 %v545, %v545
    %v687 = vpack.c.bf16 %v560, %v560
    %v688 = vpack.c.bf16 %v575, %v575
    %v689 = vpack.c.bf16 %v590, %v590
    %v690 = vpack.c.bf16 %v605, %v605
    %v691 = vpack.c.bf16 %v620, %v620
    %v692 = vpack.c.bf16 %v635, %v635
    %v693 = vld [vmem:[#allocation7] sm:$0xf]
    %v694 = vld [vmem:[#allocation7 + $0x4] sm:$0xf]
    %v695 = vld [vmem:[#allocation7 + $0x8] sm:$0xf]
    %v696 = vld [vmem:[#allocation7 + $0xc] sm:$0xf]
    %v697 = vld [vmem:[#allocation7 + $0x10] sm:$0xf]
    %v698 = vld [vmem:[#allocation7 + $0x14] sm:$0xf]
    %v699 = vld [vmem:[#allocation7 + $0x18] sm:$0xf]
    %v700 = vld [vmem:[#allocation7 + $0x1c] sm:$0xf]
    %v702 = vunpack.c.l.b16 %v685
    %v703 = vpack.c.b16 %v702, %v702
    %v704 = vunpack.c.l.b16 %v703
    %705 = vset.pattern.permute.xlu0 0
    %706 = vperm.xlu0 %705, %v704
    %v707 = vpop.permute.xlu0 %706
    %v708 = vperm.slane %v707, %v379
    %v709 = vpack.c.b16 %v708, %v708
    %v711 = vsel %vm403, %v709, 0
    %vm713 = vcmask 1043456
    %v715 = vsel %vm713, %v693, 0
    %717 = vmatpush.bf16.msra.mxu0 0
    %718 = vmatpush.bf16.msra.mxu0 0
    %719 = vmatpush.bf16.msra.mxu0 0
    %720 = vmatpush.bf16.msra.mxu0 0
    %721 = vmatpush.bf16.msra.mxu0 0
    %722 = vmatpush.bf16.msra.mxu0 0
    %723 = vmatpush.bf16.msra.mxu0 0
    %724 = vmatpush.bf16.msra.mxu0 %v715
    %725 = vmatmul.bf16.gmra.mxu0 %v711
    %v726 = vpop.f32.mrf.mxu0
    %v727 = vadd.f32 0.0, %v726
    %v728 = vpop.f32.mrf.mxu0
    %729 = vdwg.mxu0
    %v731 = vunpack.c.l.b16 %v686
    %v732 = vpack.c.b16 %v731, %v731
    %v733 = vunpack.c.l.b16 %v732
    %734 = vset.pattern.permute.xlu0 0
    %735 = vperm.xlu0 %734, %v733
    %v736 = vpop.permute.xlu0 %735
    %v737 = vperm.slane %v736, %v379
    %v738 = vpack.c.b16 %v737, %v737
    %v740 = vsel %vm403, %v738, 0
    %v743 = vsel %vm713, %v694, 0
    %745 = vmatpush.bf16.msra.mxu0 0
    %746 = vmatpush.bf16.msra.mxu0 0
    %747 = vmatpush.bf16.msra.mxu0 0
    %748 = vmatpush.bf16.msra.mxu0 0
    %749 = vmatpush.bf16.msra.mxu0 0
    %750 = vmatpush.bf16.msra.mxu0 0
    %751 = vmatpush.bf16.msra.mxu0 0
    %752 = vmatpush.bf16.msra.mxu0 %v743
    %753 = vmatmul.bf16.gmra.mxu0 %v740
    %v754 = vpop.f32.mrf.mxu0
    %v755 = vadd.f32 0.0, %v754
    %v756 = vpop.f32.mrf.mxu0
    %757 = vdwg.mxu0
    %v759 = vunpack.c.l.b16 %v687
    %v760 = vpack.c.b16 %v759, %v759
    %v761 = vunpack.c.l.b16 %v760
    %762 = vset.pattern.permute.xlu0 0
    %763 = vperm.xlu0 %762, %v761
    %v764 = vpop.permute.xlu0 %763
    %v765 = vperm.slane %v764, %v379
    %v766 = vpack.c.b16 %v765, %v765
    %v768 = vsel %vm403, %v766, 0
    %v771 = vsel %vm713, %v695, 0
    %773 = vmatpush.bf16.msra.mxu0 0
    %774 = vmatpush.bf16.msra.mxu0 0
    %775 = vmatpush.bf16.msra.mxu0 0
    %776 = vmatpush.bf16.msra.mxu0 0
    %777 = vmatpush.bf16.msra.mxu0 0
    %778 = vmatpush.bf16.msra.mxu0 0
    %779 = vmatpush.bf16.msra.mxu0 0
    %780 = vmatpush.bf16.msra.mxu0 %v771
    %781 = vmatmul.bf16.gmra.mxu0 %v768
    %v782 = vpop.f32.mrf.mxu0
    %v783 = vadd.f32 0.0, %v782
    %v784 = vpop.f32.mrf.mxu0
    %785 = vdwg.mxu0
    %v787 = vunpack.c.l.b16 %v688
    %v788 = vpack.c.b16 %v787, %v787
    %v789 = vunpack.c.l.b16 %v788
    %790 = vset.pattern.permute.xlu0 0
    %791 = vperm.xlu0 %790, %v789
    %v792 = vpop.permute.xlu0 %791
    %v793 = vperm.slane %v792, %v379
    %v794 = vpack.c.b16 %v793, %v793
    %v796 = vsel %vm403, %v794, 0
    %v799 = vsel %vm713, %v696, 0
    %801 = vmatpush.bf16.msra.mxu0 0
    %802 = vmatpush.bf16.msra.mxu0 0
    %803 = vmatpush.bf16.msra.mxu0 0
    %804 = vmatpush.bf16.msra.mxu0 0
    %805 = vmatpush.bf16.msra.mxu0 0
    %806 = vmatpush.bf16.msra.mxu0 0
    %807 = vmatpush.bf16.msra.mxu0 0
    %808 = vmatpush.bf16.msra.mxu0 %v799
    %809 = vmatmul.bf16.gmra.mxu0 %v796
    %v810 = vpop.f32.mrf.mxu0
    %v811 = vadd.f32 0.0, %v810
    %v812 = vpop.f32.mrf.mxu0
    %813 = vdwg.mxu0
    %v815 = vunpack.c.l.b16 %v689
    %v816 = vpack.c.b16 %v815, %v815
    %v817 = vunpack.c.l.b16 %v816
    %818 = vset.pattern.permute.xlu0 0
    %819 = vperm.xlu0 %818, %v817
    %v820 = vpop.permute.xlu0 %819
    %v821 = vperm.slane %v820, %v379
    %v822 = vpack.c.b16 %v821, %v821
    %v824 = vsel %vm403, %v822, 0
    %v827 = vsel %vm713, %v697, 0
    %829 = vmatpush.bf16.msra.mxu0 0
    %830 = vmatpush.bf16.msra.mxu0 0
    %831 = vmatpush.bf16.msra.mxu0 0
    %832 = vmatpush.bf16.msra.mxu0 0
    %833 = vmatpush.bf16.msra.mxu0 0
    %834 = vmatpush.bf16.msra.mxu0 0
    %835 = vmatpush.bf16.msra.mxu0 0
    %836 = vmatpush.bf16.msra.mxu0 %v827
    %837 = vmatmul.bf16.gmra.mxu0 %v824
    %v838 = vpop.f32.mrf.mxu0
    %v839 = vadd.f32 0.0, %v838
    %v840 = vpop.f32.mrf.mxu0
    %841 = vdwg.mxu0
    %v843 = vunpack.c.l.b16 %v690
    %v844 = vpack.c.b16 %v843, %v843
    %v845 = vunpack.c.l.b16 %v844
    %846 = vset.pattern.permute.xlu0 0
    %847 = vperm.xlu0 %846, %v845
    %v848 = vpop.permute.xlu0 %847
    %v849 = vperm.slane %v848, %v379
    %v850 = vpack.c.b16 %v849, %v849
    %v852 = vsel %vm403, %v850, 0
    %v855 = vsel %vm713, %v698, 0
    %857 = vmatpush.bf16.msra.mxu0 0
    %858 = vmatpush.bf16.msra.mxu0 0
    %859 = vmatpush.bf16.msra.mxu0 0
    %860 = vmatpush.bf16.msra.mxu0 0
    %861 = vmatpush.bf16.msra.mxu0 0
    %862 = vmatpush.bf16.msra.mxu0 0
    %863 = vmatpush.bf16.msra.mxu0 0
    %864 = vmatpush.bf16.msra.mxu0 %v855
    %865 = vmatmul.bf16.gmra.mxu0 %v852
    %v866 = vpop.f32.mrf.mxu0
    %v867 = vadd.f32 0.0, %v866
    %v868 = vpop.f32.mrf.mxu0
    %869 = vdwg.mxu0
    %v871 = vunpack.c.l.b16 %v691
    %v872 = vpack.c.b16 %v871, %v871
    %v873 = vunpack.c.l.b16 %v872
    %874 = vset.pattern.permute.xlu0 0
    %875 = vperm.xlu0 %874, %v873
    %v876 = vpop.permute.xlu0 %875
    %v877 = vperm.slane %v876, %v379
    %v878 = vpack.c.b16 %v877, %v877
    %v880 = vsel %vm403, %v878, 0
    %v883 = vsel %vm713, %v699, 0
    %885 = vmatpush.bf16.msra.mxu0 0
    %886 = vmatpush.bf16.msra.mxu0 0
    %887 = vmatpush.bf16.msra.mxu0 0
    %888 = vmatpush.bf16.msra.mxu0 0
    %889 = vmatpush.bf16.msra.mxu0 0
    %890 = vmatpush.bf16.msra.mxu0 0
    %891 = vmatpush.bf16.msra.mxu0 0
    %892 = vmatpush.bf16.msra.mxu0 %v883
    %893 = vmatmul.bf16.gmra.mxu0 %v880
    %v894 = vpop.f32.mrf.mxu0
    %v895 = vadd.f32 0.0, %v894
    %v896 = vpop.f32.mrf.mxu0
    %897 = vdwg.mxu0
    %v899 = vunpack.c.l.b16 %v692
    %v900 = vpack.c.b16 %v899, %v899
    %v901 = vunpack.c.l.b16 %v900
    %902 = vset.pattern.permute.xlu0 0
    %903 = vperm.xlu0 %902, %v901
    %v904 = vpop.permute.xlu0 %903
    %v905 = vperm.slane %v904, %v379
    %v906 = vpack.c.b16 %v905, %v905
    %v908 = vsel %vm403, %v906, 0
    %v911 = vsel %vm713, %v700, 0
    %913 = vmatpush.bf16.msra.mxu0 0
    %914 = vmatpush.bf16.msra.mxu0 0
    %915 = vmatpush.bf16.msra.mxu0 0
    %916 = vmatpush.bf16.msra.mxu0 0
    %917 = vmatpush.bf16.msra.mxu0 0
    %918 = vmatpush.bf16.msra.mxu0 0
    %919 = vmatpush.bf16.msra.mxu0 0
    %920 = vmatpush.bf16.msra.mxu0 %v911
    %921 = vmatmul.bf16.gmra.mxu0 %v908
    %v922 = vpop.f32.mrf.mxu0
    %v923 = vadd.f32 0.0, %v922
    %v924 = vpop.f32.mrf.mxu0
    %925 = vdwg.mxu0
    %v926 = vpack.c.bf16 %v194, %v194
    %v927 = vld [vmem:[#allocation14] sm:$0xff]
    %v928 = vld [vmem:[#allocation14 + $0x8] sm:$0xf]
    %v929 = vld [vmem:[#allocation14 + $0xc] sm:$0xff]
    %v930 = vld [vmem:[#allocation14 + $0x14] sm:$0xf]
    %v931 = vld [vmem:[#allocation14 + $0x18] sm:$0xff]
    %v932 = vld [vmem:[#allocation14 + $0x20] sm:$0xf]
    %v933 = vld [vmem:[#allocation14 + $0x24] sm:$0xff]
    %v934 = vld [vmem:[#allocation14 + $0x2c] sm:$0xf]
    %v935 = vld [vmem:[#allocation14 + $0x30] sm:$0xff]
    %v936 = vld [vmem:[#allocation14 + $0x38] sm:$0xf]
    %v937 = vld [vmem:[#allocation14 + $0x3c] sm:$0xff]
    %v938 = vld [vmem:[#allocation14 + $0x44] sm:$0xf]
    %v939 = vld [vmem:[#allocation14 + $0x48] sm:$0xff]
    %v940 = vld [vmem:[#allocation14 + $0x50] sm:$0xf]
    %v941 = vld [vmem:[#allocation14 + $0x54] sm:$0xff]
    %v942 = vld [vmem:[#allocation14 + $0x5c] sm:$0xf]
    %v943 = vpack.c.bf16 %v727, %v727
    %v944 = vpack.c.bf16 %v755, %v755
    %v945 = vpack.c.bf16 %v783, %v783
    %v946 = vpack.c.bf16 %v811, %v811
    %v947 = vpack.c.bf16 %v839, %v839
    %v948 = vpack.c.bf16 %v867, %v867
    %v949 = vpack.c.bf16 %v895, %v895
    %v950 = vpack.c.bf16 %v923, %v923
    %v951 = vld [vmem:[#allocation16] sm:$0xff]
    %v952 = vld [vmem:[#allocation16 + $0x8] sm:$0xf]
    %v953 = vld [vmem:[#allocation16 + $0xc] sm:$0xff]
    %v954 = vld [vmem:[#allocation16 + $0x14] sm:$0xf]
    %v955 = vld [vmem:[#allocation16 + $0x18] sm:$0xff]
    %v956 = vld [vmem:[#allocation16 + $0x20] sm:$0xf]
    %v957 = vld [vmem:[#allocation16 + $0x24] sm:$0xff]
    %v958 = vld [vmem:[#allocation16 + $0x2c] sm:$0xf]
    %v959 = vld [vmem:[#allocation16 + $0x30] sm:$0xff]
    %v960 = vld [vmem:[#allocation16 + $0x38] sm:$0xf]
    %v961 = vld [vmem:[#allocation16 + $0x3c] sm:$0xff]
    %v962 = vld [vmem:[#allocation16 + $0x44] sm:$0xf]
    %v963 = vld [vmem:[#allocation16 + $0x48] sm:$0xff]
    %v964 = vld [vmem:[#allocation16 + $0x50] sm:$0xf]
    %v965 = vld [vmem:[#allocation16 + $0x54] sm:$0xff]
    %v966 = vld [vmem:[#allocation16 + $0x5c] sm:$0xf]
    %v967 = vld [vmem:[#allocation16 + $0x60] sm:$0xff]
    %v968 = vld [vmem:[#allocation16 + $0x68] sm:$0xf]
    %v969 = vld [vmem:[#allocation16 + $0x6c] sm:$0xff]
    %v970 = vld [vmem:[#allocation16 + $0x74] sm:$0xf]
    %v971 = vld [vmem:[#allocation16 + $0x78] sm:$0xff]
    %v972 = vld [vmem:[#allocation16 + $0x80] sm:$0xf]
    %v973 = vld [vmem:[#allocation16 + $0x84] sm:$0xff]
    %v974 = vld [vmem:[#allocation16 + $0x8c] sm:$0xf]
    %v975 = vld [vmem:[#allocation16 + $0x90] sm:$0xff]
    %v976 = vld [vmem:[#allocation16 + $0x98] sm:$0xf]
    %v977 = vld [vmem:[#allocation16 + $0x9c] sm:$0xff]
    %v978 = vld [vmem:[#allocation16 + $0xa4] sm:$0xf]
    %v979 = vld [vmem:[#allocation16 + $0xa8] sm:$0xff]
    %v980 = vld [vmem:[#allocation16 + $0xb0] sm:$0xf]
    %v981 = vld [vmem:[#allocation16 + $0xb4] sm:$0xff]
    %v982 = vld [vmem:[#allocation16 + $0xbc] sm:$0xf]
    %v991 = vunpack.c.l.b16 %v943
    %v992 = vunpack.c.l.b16 %v944
    %v993 = vunpack.c.l.b16 %v945
    %v994 = vunpack.c.l.b16 %v946
    %v995 = vunpack.c.l.b16 %v947
    %v996 = vunpack.c.l.b16 %v948
    %v997 = vunpack.c.l.b16 %v949
    %v998 = vunpack.c.l.b16 %v950
    %v999 = vrot.slane %v992, 7
    %v1000 = vsel %vm388, %v999, %v991
    %v1001 = vrot.slane %v993, 6
    %v1002 = vsel %vm390, %v1001, %v1000
    %v1003 = vrot.slane %v994, 5
    %v1004 = vsel %vm392, %v1003, %v1002
    %v1005 = vrot.slane %v995, 4
    %v1006 = vsel %vm394, %v1005, %v1004
    %v1007 = vrot.slane %v996, 3
    %v1008 = vsel %vm396, %v1007, %v1006
    %v1009 = vrot.slane %v997, 2
    %v1010 = vsel %vm398, %v1009, %v1008
    %v1011 = vrot.slane %v998, 1
    %v1012 = vsel %vm400, %v1011, %v1010
    %v1013 = vpack.c.b16 %v1012, %v1012
    %v1047 = vunpack.c.l.b16 %v951
    %v1048 = vunpack.c.h.b16 %v951
    %v1049 = vunpack.c.l.b16 %v952
    %v1050 = vunpack.c.l.b16 %v953
    %v1051 = vunpack.c.h.b16 %v953
    %v1052 = vunpack.c.l.b16 %v954
    %v1053 = vunpack.c.l.b16 %v955
    %v1054 = vunpack.c.h.b16 %v955
    %v1055 = vunpack.c.l.b16 %v956
    %v1056 = vunpack.c.l.b16 %v957
    %v1057 = vunpack.c.h.b16 %v957
    %v1058 = vunpack.c.l.b16 %v958
    %v1059 = vunpack.c.l.b16 %v959
    %v1060 = vunpack.c.h.b16 %v959
    %v1061 = vunpack.c.l.b16 %v960
    %v1062 = vunpack.c.l.b16 %v961
    %v1063 = vunpack.c.h.b16 %v961
    %v1064 = vunpack.c.l.b16 %v962
    %v1065 = vunpack.c.l.b16 %v963
    %v1066 = vunpack.c.h.b16 %v963
    %v1067 = vunpack.c.l.b16 %v964
    %v1068 = vunpack.c.l.b16 %v965
    %v1069 = vunpack.c.h.b16 %v965
    %v1070 = vunpack.c.l.b16 %v966
    %v1071 = vunpack.c.l.b16 %v967
    %v1072 = vunpack.c.h.b16 %v967
    %v1073 = vunpack.c.l.b16 %v968
    %v1074 = vunpack.c.l.b16 %v969
    %v1075 = vunpack.c.h.b16 %v969
    %v1076 = vunpack.c.l.b16 %v970
    %v1077 = vunpack.c.l.b16 %v971
    %v1078 = vunpack.c.h.b16 %v971
    %v1079 = vunpack.c.l.b16 %v972
    %v1080 = vunpack.c.l.b16 %v973
    %v1081 = vunpack.c.h.b16 %v973
    %v1082 = vunpack.c.l.b16 %v974
    %v1083 = vunpack.c.l.b16 %v975
    %v1084 = vunpack.c.h.b16 %v975
    %v1085 = vunpack.c.l.b16 %v976
    %v1086 = vunpack.c.l.b16 %v977
    %v1087 = vunpack.c.h.b16 %v977
    %v1088 = vunpack.c.l.b16 %v978
    %v1089 = vunpack.c.l.b16 %v979
    %v1090 = vunpack.c.h.b16 %v979
    %v1091 = vunpack.c.l.b16 %v980
    %v1092 = vunpack.c.l.b16 %v981
    %v1093 = vunpack.c.h.b16 %v981
    %v1094 = vunpack.c.l.b16 %v982
    %v1095 = vpack.c.b16 %v1050, %v1047
    %v1096 = vpack.c.b16 %v1051, %v1048
    %v1097 = vpack.c.b16 %v1052, %v1049
    %v1098 = vpack.c.b16 %v1056, %v1053
    %v1099 = vpack.c.b16 %v1057, %v1054
    %v1100 = vpack.c.b16 %v1058, %v1055
    %v1101 = vpack.c.b16 %v1062, %v1059
    %v1102 = vpack.c.b16 %v1063, %v1060
    %v1103 = vpack.c.b16 %v1064, %v1061
    %v1104 = vpack.c.b16 %v1068, %v1065
    %v1105 = vpack.c.b16 %v1069, %v1066
    %v1106 = vpack.c.b16 %v1070, %v1067
    %v1107 = vpack.c.b16 %v1074, %v1071
    %v1108 = vpack.c.b16 %v1075, %v1072
    %v1109 = vpack.c.b16 %v1076, %v1073
    %v1110 = vpack.c.b16 %v1080, %v1077
    %v1111 = vpack.c.b16 %v1081, %v1078
    %v1112 = vpack.c.b16 %v1082, %v1079
    %v1113 = vpack.c.b16 %v1086, %v1083
    %v1114 = vpack.c.b16 %v1087, %v1084
    %v1115 = vpack.c.b16 %v1088, %v1085
    %v1116 = vpack.c.b16 %v1092, %v1089
    %v1117 = vpack.c.b16 %v1093, %v1090
    %v1118 = vpack.c.b16 %v1094, %v1091
    %1143 = vmatpush.bf16.msra.mxu0 %v1116
    %1144 = vmatpush.bf16.msra.mxu0 %v1113
    %1145 = vmatpush.bf16.msra.mxu0 %v1110
    %1146 = vmatpush.bf16.msra.mxu0 %v1107
    %1147 = vmatpush.bf16.msra.mxu0 %v1104
    %1148 = vmatpush.bf16.msra.mxu0 %v1101
    %1149 = vmatpush.bf16.msra.mxu0 %v1098
    %1150 = vmatpush.bf16.msra.mxu0 %v1095
    %1151 = vmatmul.bf16.gmra.mxu0 %v1013
    %v1152 = vpop.f32.mrf.mxu0
    %v1153 = vadd.f32 0.0, %v1152
    %v1154 = vpop.f32.mrf.mxu0
    %1155 = vdwg.mxu0
    %1156 = vmatpush.bf16.msra.mxu0 %v1117
    %1157 = vmatpush.bf16.msra.mxu0 %v1114
    %1158 = vmatpush.bf16.msra.mxu0 %v1111
    %1159 = vmatpush.bf16.msra.mxu0 %v1108
    %1160 = vmatpush.bf16.msra.mxu0 %v1105
    %1161 = vmatpush.bf16.msra.mxu0 %v1102
    %1162 = vmatpush.bf16.msra.mxu0 %v1099
    %1163 = vmatpush.bf16.msra.mxu0 %v1096
    %1164 = vmatmul.bf16.gmra.mxu0 %v1013
    %v1165 = vpop.f32.mrf.mxu0
    %v1166 = vadd.f32 0.0, %v1165
    %v1167 = vpop.f32.mrf.mxu0
    %1168 = vdwg.mxu0
    %1169 = vmatpush.bf16.msra.mxu0 %v1118
    %1170 = vmatpush.bf16.msra.mxu0 %v1115
    %1171 = vmatpush.bf16.msra.mxu0 %v1112
    %1172 = vmatpush.bf16.msra.mxu0 %v1109
    %1173 = vmatpush.bf16.msra.mxu0 %v1106
    %1174 = vmatpush.bf16.msra.mxu0 %v1103
    %1175 = vmatpush.bf16.msra.mxu0 %v1100
    %1176 = vmatpush.bf16.msra.mxu0 %v1097
    %1177 = vmatmul.bf16.gmra.mxu0 %v1013
    %v1178 = vpop.f32.mrf.mxu0
    %v1179 = vadd.f32 0.0, %v1178
    %v1180 = vpop.f32.mrf.mxu0
    %1181 = vdwg.mxu0
    %v1198 = vunpack.c.l.b16 %v927
    %v1199 = vunpack.c.h.b16 %v927
    %v1200 = vunpack.c.l.b16 %v928
    %v1201 = vunpack.c.l.b16 %v929
    %v1202 = vunpack.c.h.b16 %v929
    %v1203 = vunpack.c.l.b16 %v930
    %v1204 = vunpack.c.l.b16 %v931
    %v1205 = vunpack.c.h.b16 %v931
    %v1206 = vunpack.c.l.b16 %v932
    %v1207 = vunpack.c.l.b16 %v933
    %v1208 = vunpack.c.h.b16 %v933
    %v1209 = vunpack.c.l.b16 %v934
    %v1210 = vunpack.c.l.b16 %v935
    %v1211 = vunpack.c.h.b16 %v935
    %v1212 = vunpack.c.l.b16 %v936
    %v1213 = vunpack.c.l.b16 %v937
    %v1214 = vunpack.c.h.b16 %v937
    %v1215 = vunpack.c.l.b16 %v938
    %v1216 = vunpack.c.l.b16 %v939
    %v1217 = vunpack.c.h.b16 %v939
    %v1218 = vunpack.c.l.b16 %v940
    %v1219 = vunpack.c.l.b16 %v941
    %v1220 = vunpack.c.h.b16 %v941
    %v1221 = vunpack.c.l.b16 %v942
    %v1222 = vpack.c.b16 %v1201, %v1198
    %v1223 = vpack.c.b16 %v1202, %v1199
    %v1224 = vpack.c.b16 %v1203, %v1200
    %v1225 = vpack.c.b16 %v1207, %v1204
    %v1226 = vpack.c.b16 %v1208, %v1205
    %v1227 = vpack.c.b16 %v1209, %v1206
    %v1228 = vpack.c.b16 %v1213, %v1210
    %v1229 = vpack.c.b16 %v1214, %v1211
    %v1230 = vpack.c.b16 %v1215, %v1212
    %v1231 = vpack.c.b16 %v1219, %v1216
    %v1232 = vpack.c.b16 %v1220, %v1217
    %v1233 = vpack.c.b16 %v1221, %v1218
    %vm1246 = vcmask 523264
    %v1248 = vsel %vm1246, %v926, 0
    %1250 = vmatpush.bf16.msra.mxu0 0
    %1251 = vmatpush.bf16.msra.mxu0 0
    %1252 = vmatpush.bf16.msra.mxu0 0
    %1253 = vmatpush.bf16.msra.mxu0 0
    %1254 = vmatpush.bf16.msra.mxu0 %v1231
    %1255 = vmatpush.bf16.msra.mxu0 %v1228
    %1256 = vmatpush.bf16.msra.mxu0 %v1225
    %1257 = vmatpush.bf16.msra.mxu0 %v1222
    %1258 = vmatmul.bf16.gmra.mxu0 %v1248
    %v1259 = vpop.f32.mrf.mxu0
    %v1260 = vadd.f32 %v1153, %v1259
    %v1261 = vpop.f32.mrf.mxu0
    %1262 = vdwg.mxu0
    %1263 = vmatpush.bf16.msra.mxu0 0
    %1264 = vmatpush.bf16.msra.mxu0 0
    %1265 = vmatpush.bf16.msra.mxu0 0
    %1266 = vmatpush.bf16.msra.mxu0 0
    %1267 = vmatpush.bf16.msra.mxu0 %v1232
    %1268 = vmatpush.bf16.msra.mxu0 %v1229
    %1269 = vmatpush.bf16.msra.mxu0 %v1226
    %1270 = vmatpush.bf16.msra.mxu0 %v1223
    %1271 = vmatmul.bf16.gmra.mxu0 %v1248
    %v1272 = vpop.f32.mrf.mxu0
    %v1273 = vadd.f32 %v1166, %v1272
    %v1274 = vpop.f32.mrf.mxu0
    %1275 = vdwg.mxu0
    %1276 = vmatpush.bf16.msra.mxu0 0
    %1277 = vmatpush.bf16.msra.mxu0 0
    %1278 = vmatpush.bf16.msra.mxu0 0
    %1279 = vmatpush.bf16.msra.mxu0 0
    %1280 = vmatpush.bf16.msra.mxu0 %v1233
    %1281 = vmatpush.bf16.msra.mxu0 %v1230
    %1282 = vmatpush.bf16.msra.mxu0 %v1227
    %1283 = vmatpush.bf16.msra.mxu0 %v1224
    %1284 = vmatmul.bf16.gmra.mxu0 %v1248
    %v1285 = vpop.f32.mrf.mxu0
    %v1286 = vadd.f32 %v1179, %v1285
    %v1287 = vpop.f32.mrf.mxu0
    %1288 = vdwg.mxu0
    %v1289 = vld [vmem:[%s10] sm:$0x7]
    %v1291 = vperm.slane %v1289, 0
    %v1292 = vperm.slane %v1289, 1
    %v1293 = vperm.slane %v1289, 2
    %v1297 = vadd.f32 %v1260, %v1291
    %v1298 = vadd.f32 %v1273, %v1292
    %v1299 = vadd.f32 %v1286, %v1293
    %v1300 = vld [vmem:[#allocation17] sm:$0xff]
    %v1301 = vld [vmem:[#allocation17 + $0x8] sm:$0xf]
    %v1302 = vld [vmem:[#allocation17 + $0xc] sm:$0xff]
    %v1303 = vld [vmem:[#allocation17 + $0x14] sm:$0xf]
    %v1304 = vld [vmem:[#allocation17 + $0x18] sm:$0xff]
    %v1305 = vld [vmem:[#allocation17 + $0x20] sm:$0xf]
    %v1306 = vld [vmem:[#allocation17 + $0x24] sm:$0xff]
    %v1307 = vld [vmem:[#allocation17 + $0x2c] sm:$0xf]
    %v1308 = vld [vmem:[#allocation17 + $0x30] sm:$0xff]
    %v1309 = vld [vmem:[#allocation17 + $0x38] sm:$0xf]
    %v1310 = vld [vmem:[#allocation17 + $0x3c] sm:$0xff]
    %v1311 = vld [vmem:[#allocation17 + $0x44] sm:$0xf]
    %v1312 = vld [vmem:[#allocation17 + $0x48] sm:$0xff]
    %v1313 = vld [vmem:[#allocation17 + $0x50] sm:$0xf]
    %v1314 = vld [vmem:[#allocation17 + $0x54] sm:$0xff]
    %v1315 = vld [vmem:[#allocation17 + $0x5c] sm:$0xf]
    %v1316 = vld [vmem:[#allocation17 + $0x60] sm:$0xff]
    %v1317 = vld [vmem:[#allocation17 + $0x68] sm:$0xf]
    %v1318 = vld [vmem:[#allocation17 + $0x6c] sm:$0xff]
    %v1319 = vld [vmem:[#allocation17 + $0x74] sm:$0xf]
    %v1320 = vld [vmem:[#allocation17 + $0x78] sm:$0xff]
    %v1321 = vld [vmem:[#allocation17 + $0x80] sm:$0xf]
    %v1322 = vld [vmem:[#allocation17 + $0x84] sm:$0xff]
    %v1323 = vld [vmem:[#allocation17 + $0x8c] sm:$0xf]
    %v1324 = vld [vmem:[#allocation17 + $0x90] sm:$0xff]
    %v1325 = vld [vmem:[#allocation17 + $0x98] sm:$0xf]
    %v1326 = vld [vmem:[#allocation17 + $0x9c] sm:$0xff]
    %v1327 = vld [vmem:[#allocation17 + $0xa4] sm:$0xf]
    %v1328 = vld [vmem:[#allocation17 + $0xa8] sm:$0xff]
    %v1329 = vld [vmem:[#allocation17 + $0xb0] sm:$0xf]
    %v1330 = vld [vmem:[#allocation17 + $0xb4] sm:$0xff]
    %v1331 = vld [vmem:[#allocation17 + $0xbc] sm:$0xf]
    %v1332 = vld [vmem:[%s11] sm:$0x7]
    %v1334 = vperm.slane %v1332, 0
    %v1335 = vperm.slane %v1332, 1
    %v1336 = vperm.slane %v1332, 2
    %v1372 = vunpack.c.l.b16 %v1300
    %v1373 = vunpack.c.h.b16 %v1300
    %v1374 = vunpack.c.l.b16 %v1301
    %v1375 = vunpack.c.l.b16 %v1302
    %v1376 = vunpack.c.h.b16 %v1302
    %v1377 = vunpack.c.l.b16 %v1303
    %v1378 = vunpack.c.l.b16 %v1304
    %v1379 = vunpack.c.h.b16 %v1304
    %v1380 = vunpack.c.l.b16 %v1305
    %v1381 = vunpack.c.l.b16 %v1306
    %v1382 = vunpack.c.h.b16 %v1306
    %v1383 = vunpack.c.l.b16 %v1307
    %v1384 = vunpack.c.l.b16 %v1308
    %v1385 = vunpack.c.h.b16 %v1308
    %v1386 = vunpack.c.l.b16 %v1309
    %v1387 = vunpack.c.l.b16 %v1310
    %v1388 = vunpack.c.h.b16 %v1310
    %v1389 = vunpack.c.l.b16 %v1311
    %v1390 = vunpack.c.l.b16 %v1312
    %v1391 = vunpack.c.h.b16 %v1312
    %v1392 = vunpack.c.l.b16 %v1313
    %v1393 = vunpack.c.l.b16 %v1314
    %v1394 = vunpack.c.h.b16 %v1314
    %v1395 = vunpack.c.l.b16 %v1315
    %v1396 = vunpack.c.l.b16 %v1316
    %v1397 = vunpack.c.h.b16 %v1316
    %v1398 = vunpack.c.l.b16 %v1317
    %v1399 = vunpack.c.l.b16 %v1318
    %v1400 = vunpack.c.h.b16 %v1318
    %v1401 = vunpack.c.l.b16 %v1319
    %v1402 = vunpack.c.l.b16 %v1320
    %v1403 = vunpack.c.h.b16 %v1320
    %v1404 = vunpack.c.l.b16 %v1321
    %v1405 = vunpack.c.l.b16 %v1322
    %v1406 = vunpack.c.h.b16 %v1322
    %v1407 = vunpack.c.l.b16 %v1323
    %v1408 = vunpack.c.l.b16 %v1324
    %v1409 = vunpack.c.h.b16 %v1324
    %v1410 = vunpack.c.l.b16 %v1325
    %v1411 = vunpack.c.l.b16 %v1326
    %v1412 = vunpack.c.h.b16 %v1326
    %v1413 = vunpack.c.l.b16 %v1327
    %v1414 = vunpack.c.l.b16 %v1328
    %v1415 = vunpack.c.h.b16 %v1328
    %v1416 = vunpack.c.l.b16 %v1329
    %v1417 = vunpack.c.l.b16 %v1330
    %v1418 = vunpack.c.h.b16 %v1330
    %v1419 = vunpack.c.l.b16 %v1331
    %v1420 = vpack.c.b16 %v1375, %v1372
    %v1421 = vpack.c.b16 %v1376, %v1373
    %v1422 = vpack.c.b16 %v1377, %v1374
    %v1423 = vpack.c.b16 %v1381, %v1378
    %v1424 = vpack.c.b16 %v1382, %v1379
    %v1425 = vpack.c.b16 %v1383, %v1380
    %v1426 = vpack.c.b16 %v1387, %v1384
    %v1427 = vpack.c.b16 %v1388, %v1385
    %v1428 = vpack.c.b16 %v1389, %v1386
    %v1429 = vpack.c.b16 %v1393, %v1390
    %v1430 = vpack.c.b16 %v1394, %v1391
    %v1431 = vpack.c.b16 %v1395, %v1392
    %v1432 = vpack.c.b16 %v1399, %v1396
    %v1433 = vpack.c.b16 %v1400, %v1397
    %v1434 = vpack.c.b16 %v1401, %v1398
    %v1435 = vpack.c.b16 %v1405, %v1402
    %v1436 = vpack.c.b16 %v1406, %v1403
    %v1437 = vpack.c.b16 %v1407, %v1404
    %v1438 = vpack.c.b16 %v1411, %v1408
    %v1439 = vpack.c.b16 %v1412, %v1409
    %v1440 = vpack.c.b16 %v1413, %v1410
    %v1441 = vpack.c.b16 %v1417, %v1414
    %v1442 = vpack.c.b16 %v1418, %v1415
    %v1443 = vpack.c.b16 %v1419, %v1416
    %1468 = vmatpush.bf16.msra.mxu0 %v1441
    %1469 = vmatpush.bf16.msra.mxu0 %v1438
    %1470 = vmatpush.bf16.msra.mxu0 %v1435
    %1471 = vmatpush.bf16.msra.mxu0 %v1432
    %1472 = vmatpush.bf16.msra.mxu0 %v1429
    %1473 = vmatpush.bf16.msra.mxu0 %v1426
    %1474 = vmatpush.bf16.msra.mxu0 %v1423
    %1475 = vmatpush.bf16.msra.mxu0 %v1420
    %1476 = vmatmul.bf16.gmra.mxu0 %v196
    %v1477 = vpop.f32.mrf.mxu0
    %v1478 = vadd.f32 %v1334, %v1477
    %v1479 = vpop.f32.mrf.mxu0
    %1480 = vdwg.mxu0
    %1481 = vmatpush.bf16.msra.mxu0 %v1442
    %1482 = vmatpush.bf16.msra.mxu0 %v1439
    %1483 = vmatpush.bf16.msra.mxu0 %v1436
    %1484 = vmatpush.bf16.msra.mxu0 %v1433
    %1485 = vmatpush.bf16.msra.mxu0 %v1430
    %1486 = vmatpush.bf16.msra.mxu0 %v1427
    %1487 = vmatpush.bf16.msra.mxu0 %v1424
    %1488 = vmatpush.bf16.msra.mxu0 %v1421
    %1489 = vmatmul.bf16.gmra.mxu0 %v196
    %v1490 = vpop.f32.mrf.mxu0
    %v1491 = vadd.f32 %v1335, %v1490
    %v1492 = vpop.f32.mrf.mxu0
    %1493 = vdwg.mxu0
    %1494 = vmatpush.bf16.msra.mxu0 %v1443
    %1495 = vmatpush.bf16.msra.mxu0 %v1440
    %1496 = vmatpush.bf16.msra.mxu0 %v1437
    %1497 = vmatpush.bf16.msra.mxu0 %v1434
    %1498 = vmatpush.bf16.msra.mxu0 %v1431
    %1499 = vmatpush.bf16.msra.mxu0 %v1428
    %1500 = vmatpush.bf16.msra.mxu0 %v1425
    %1501 = vmatpush.bf16.msra.mxu0 %v1422
    %1502 = vmatmul.bf16.gmra.mxu0 %v196
    %v1503 = vpop.f32.mrf.mxu0
    %v1504 = vadd.f32 %v1336, %v1503
    %v1505 = vpop.f32.mrf.mxu0
    %1506 = vdwg.mxu0
    %v1507 = vadd.f32 %v1297, %v1478
    %v1508 = vxor.u32 %v1507, 2147483648
    %v1509 = vmul.f32 %v1508, 1.442695
    %v1510 = vpow.pop %v1509
    %v1511 = vadd.f32 %v1510, 1.0
    %v1512 = vrcp.pop %v1511
    %v1513 = vmul.f32 %v1511, %v1512
    %v1514 = vsub.f32 1.0, %v1513
    %v1515 = vmul.f32 %v1512, %v1514
    %v1516 = vadd.f32 %v1512, %v1515
    %vm1517 = vweird.f32 %v1511
    %vm1518 = vweird.f32 %v1512
    %vm1519 = vmor %vm1517, %vm1518
    %v1520 = vsel %vm1519, %v1512, %v1516
    %v1521 = vand.u32 2147483647, %v1511
    %vm1522 = vcmp.eq.f32.partialorder %v1521, 8.507059e+37
    %v1523 = vand.u32 %v1511, 2147483648
    %v1524 = vor.u32 1.1754944e-38, %v1523
    %v1525 = vsel %vm1522, %v1524, %v1520
    %v1526 = vmul.f32 1.0, %v1525
    %v1527 = vadd.f32 %v1298, %v1491
    %v1528 = vxor.u32 %v1527, 2147483648
    %v1529 = vmul.f32 %v1528, 1.442695
    %v1530 = vpow.pop %v1529
    %v1531 = vadd.f32 %v1530, 1.0
    %v1532 = vrcp.pop %v1531
    %v1533 = vmul.f32 %v1531, %v1532
    %v1534 = vsub.f32 1.0, %v1533
    %v1535 = vmul.f32 %v1532, %v1534
    %v1536 = vadd.f32 %v1532, %v1535
    %vm1537 = vweird.f32 %v1531
    %vm1538 = vweird.f32 %v1532
    %vm1539 = vmor %vm1537, %vm1538
    %v1540 = vsel %vm1539, %v1532, %v1536
    %v1541 = vand.u32 2147483647, %v1531
    %vm1542 = vcmp.eq.f32.partialorder %v1541, 8.507059e+37
    %v1543 = vand.u32 %v1531, 2147483648
    %v1544 = vor.u32 1.1754944e-38, %v1543
    %v1545 = vsel %vm1542, %v1544, %v1540
    %v1546 = vmul.f32 1.0, %v1545
    %v1547 = vmul.f32 %v1526, %v1504
    %v1548 = vadd.f32 %v1299, %v1547
    %v1549 = vtanh.pop %v1548
    %v1550 = vsub.f32 1.0, %v1546
    %v1551 = vmul.f32 %v1550, %v1549
    %v1552 = vmul.f32 %v1546, %v195
    %v1553 = vadd.f32 %v1551, %v1552
    %1554 = vst [vmem:[#allocation19] sm:$0xff] %v1553
    // Predicated region
    $region90: #{tpu_custom_call.1} parent=1 // pred_check
      _
    $region91: #{tpu_custom_call.1} parent=1 // pred_check_branch
      %1556 = sbr.rel (0) target = $region93
    $region92: #{tpu_custom_call.1} parent=1 // pred_region
      %1558 = vsyncadd [#allocation4], 0
      %s1560 = sshll.u32 [#allocation19], 4
      %s1561 = int_to_ptr.vmem [resolvable:$true] %s1560
      %s1562 = sshll.u32 %s12, 4
      %s1563 = int_to_ptr.hbm [resolvable:$true] %s1562
      %1565 = dma.vmem_to_hbm [thread:$0]  %s1561, 128, %s1563, [#allocation4]
    $region93: #{tpu_custom_call.1} parent=1 // pred_fallthru
      _
    // Predicated region
    $region94: #{tpu_custom_call.1} parent=1 // pred_check
      _
    $region95: #{tpu_custom_call.1} parent=1 // pred_check_branch
      %1567 = sbr.rel (0) target = $region97
    $region96: #{tpu_custom_call.1} parent=1 // pred_region
      %1569 = vsyncadd [#allocation21], 0
      %s1571 = sshll.u32 [#allocation20], 4
      %s1572 = int_to_ptr.vmem [resolvable:$true] %s1571
      %s1573 = sshll.u32 %s13, 4
      %s1574 = int_to_ptr.hbm [resolvable:$true] %s1573
      %1576 = dma.vmem_to_hbm [thread:$0]  %s1572, 128, %s1574, [#allocation21]
    $region97: #{tpu_custom_call.1} parent=1 // pred_fallthru
      _
    // Predicated region
    $region98: #{tpu_custom_call.1} parent=1 // pred_check
      _
    $region99: #{tpu_custom_call.1} parent=1 // pred_check_branch
      %1578 = sbr.rel (0) target = $region101
    $region100: #{tpu_custom_call.1} parent=1 // pred_region
      %1580 = dma.done [#allocation4], 128
    $region101: #{tpu_custom_call.1} parent=1 // pred_fallthru
      _
    // Predicated region
    $region102: #{tpu_custom_call.1} parent=1 // pred_check
      _
    $region103: #{tpu_custom_call.1} parent=1 // pred_check_branch
      %1582 = sbr.rel (0) target = $region105
    $region104: #{tpu_custom_call.1} parent=1 // pred_region
      %1584 = dma.done [#allocation21], 128
    $region105: #{tpu_custom_call.1} parent=1 // pred_fallthru
      _
    %1585 = vsyncpa [#allocation3], 1
    %1586 = vsyncpa [#allocation6], 1
    %1587 = vsyncpa [#allocation9], 1
    %1588 = vsyncpa [#allocation12], 1
    %1589 = vsyncpa [#allocation15], 1
    %1590 = vsyncpa [#allocation18], 1
    %1591 = vsyncpa [#allocation4], 1
    %1592 = vsyncpa [#allocation21], 1

</llo_original>
